<compile_context>
chip_gen: v7x
topology: tpu7x:2x2x1
jax: 0.10.0
libtpu: 0.0.40
codegen_flags: <defaults>
</compile_context>

<pallas_src>
import functools

import jax
import jax.numpy as jnp
from jax.experimental import pallas as pl
from jax.experimental.pallas import tpu as pltpu


D_MODEL = 128
D_FF = 2048
N_HIDDEN = 64
LN_EPS = 1e-5


def _round_up(n, m):
    return ((n + m - 1) // m) * m


def _layernorm(x, gamma, beta, eps=LN_EPS):
    mu = jnp.mean(x, axis=-1, keepdims=True)
    var = jnp.mean((x - mu) ** 2, axis=-1, keepdims=True)
    return (x - mu) * jax.lax.rsqrt(var + eps) * gamma + beta


def _normalize(x, eps=LN_EPS):
    mu = jnp.mean(x, axis=-1, keepdims=True)
    var = jnp.mean((x - mu) ** 2, axis=-1, keepdims=True)
    return (x - mu) * jax.lax.rsqrt(var + eps)


# -----------------------------------------------------------------------------
# Kernel
# -----------------------------------------------------------------------------
def net_kernel(x_ref,
               w1_ref, b1_ref,
               w2_ref, b2_ref,
               wa_ref, ba_ref,          # folded attention:  Wv @ Wo,  bv @ Wo + bo
               ln1g_ref, ln1b_ref,
               wf1_ref, bf1_ref,
               wf2_ref, bf2_ref,
               w3_ref, b3_ref,          # ln2-affine folded in, padded to lane-dense width
               out_ref):
    f32 = jnp.float32
    x = x_ref[...]

    # layer1 + relu
    h = jnp.dot(x, w1_ref[...].astype(f32), preferred_element_type=f32) + b1_ref[...]
    h = jnp.maximum(h, 0.0)

    # layer2 + relu   (w2 stored bf16 -> cast up, matmul in f32)
    h = jnp.dot(h, w2_ref[...].astype(f32), preferred_element_type=f32) + b2_ref[...]
    h = jnp.maximum(h, 0.0)

    # --- TransformerEncoderLayer, seq_len == 1, post-norm, dropout = identity ---
    # softmax over a single key == 1  =>  attn = out_proj(value_proj(h)) = h @ (Wv@Wo) + (bv@Wo+bo)
    attn = jnp.dot(h, wa_ref[...], preferred_element_type=f32) + ba_ref[...]
    s = _layernorm(h + attn, ln1g_ref[...], ln1b_ref[...])

    # feed-forward block (bf16-stored weights, f32 math)
    f = jnp.dot(s, wf1_ref[...].astype(f32), preferred_element_type=f32) + bf1_ref[...]
    f = jnp.maximum(f, 0.0)
    f = jnp.dot(f, wf2_ref[...].astype(f32), preferred_element_type=f32) + bf2_ref[...]

    # second LayerNorm: affine folded into w3/b3, so only normalize here
    t = _normalize(s + f)

    # layer3 (ln2 affine folded in; padded to lane-dense output width)
    out_ref[...] = jnp.dot(t, w3_ref[...], preferred_element_type=f32) + b3_ref[...]


# -----------------------------------------------------------------------------
# Parameters
# -----------------------------------------------------------------------------
def make_params(key, n_feature, n_output):
    """Deterministic synthetic parameters in (in_features, out_features) layout."""
    ks = jax.random.split(key, 18)

    def w(k, i, o, dtype=jnp.float32, scale=0.05):
        return (scale * jax.random.normal(k, (i, o), jnp.float32)).astype(dtype)

    def b(k, o, scale=0.02):
        return scale * jax.random.normal(k, (1, o), jnp.float32)

    return dict(
        w1=w(ks[0], n_feature, N_HIDDEN),               b1=b(ks[1], N_HIDDEN),
        w2=w(ks[2], N_HIDDEN, D_MODEL, jnp.bfloat16),   b2=b(ks[3], D_MODEL),
        # MHA in_proj slices (q/k only used by the reference; softmax over one key == 1)
        wq=w(ks[4], D_MODEL, D_MODEL),                  bq=b(ks[5], D_MODEL),
        wk=w(ks[6], D_MODEL, D_MODEL),                  bk=b(ks[7], D_MODEL),
        wv=w(ks[8], D_MODEL, D_MODEL),                  bv=b(ks[9], D_MODEL),
        wo=w(ks[10], D_MODEL, D_MODEL),                 bo=b(ks[11], D_MODEL),
        ln1g=jnp.ones((1, D_MODEL), jnp.float32),       ln1b=jnp.zeros((1, D_MODEL), jnp.float32),
        wf1=w(ks[12], D_MODEL, D_FF, jnp.bfloat16),     bf1=b(ks[13], D_FF),
        wf2=w(ks[14], D_FF, D_MODEL, jnp.bfloat16),     bf2=b(ks[15], D_MODEL),
        ln2g=jnp.ones((1, D_MODEL), jnp.float32),       ln2b=jnp.zeros((1, D_MODEL), jnp.float32),
        w3=w(ks[16], D_MODEL, n_output),                b3=b(ks[17], n_output),
    )


def prepare_kernel_params(p):
    """Offline algebraic folding (exact up to f32 rounding-order)."""
    f32 = lambda a: a.astype(jnp.float32)

    # Fold attention value+output projections (valid because seq_len == 1 -> softmax == 1).
    wv, wo = f32(p["wv"]), f32(p["wo"])
    wa = wv @ wo
    ba = f32(p["bv"]) @ wo + f32(p["bo"])

    # Fold ln2 affine into layer3.
    w3 = f32(p["w3"])
    n_out = w3.shape[1]
    w3f = f32(p["ln2g"]).reshape(-1, 1) * w3
    b3f = f32(p["ln2b"]) @ w3 + f32(p["b3"])

    # Pad layer3 output to a lane-dense multiple of 128 (unmasked stores); slice outside kernel.
    n_pad = _round_up(max(n_out, 1), 128)
    w3p = jnp.zeros((D_MODEL, n_pad), jnp.float32).at[:, :n_out].set(w3f)
    b3p = jnp.zeros((1, n_pad), jnp.float32).at[:, :n_out].set(b3f)

    kernel_params = [
        p["w1"], p["b1"],
        p["w2"], p["b2"],
        wa, ba,
        p["ln1g"], p["ln1b"],
        p["wf1"], p["bf1"],
        p["wf2"], p["bf2"],
        w3p, b3p,
    ]
    return kernel_params, n_out, n_pad


# -----------------------------------------------------------------------------
# Wrapper
# -----------------------------------------------------------------------------
@functools.partial(jax.jit, static_argnames=("tb",))
def net_forward(x, params, *, tb=None):
    kp, n_out, n_pad = prepare_kernel_params(params)

    B, n_feature = x.shape
    if tb is None:
        # Batch tile: multiple of 8 sublanes, capped so the (tb, 2048) f32 FF intermediate and
        # double-buffered tiles stay well inside v7x's 64 MiB VMEM (32 MiB scoped default).
        tb = min(256, _round_up(B, 8))
    bp = _round_up(B, tb)
    if bp != B:
        x = jnp.pad(x, ((0, bp - B), (0, 0)))

    grid = (bp // tb,)

    in_specs = [pl.BlockSpec((tb, n_feature), lambda i: (i, 0))]
    for a in kp:
        # Weights / biases: full-array block, constant index_map -> resident across grid steps.
        in_specs.append(pl.BlockSpec(a.shape, lambda i: (0, 0)))
    out_specs = pl.BlockSpec((tb, n_pad), lambda i: (i, 0))

    flops = 2 * bp * (n_feature * N_HIDDEN + N_HIDDEN * D_MODEL + D_MODEL * D_MODEL
                      + D_MODEL * D_FF + D_FF * D_MODEL + D_MODEL * n_pad)
    bytes_accessed = int(x.size * 4 + bp * n_pad * 4 + sum(int(a.size * a.dtype.itemsize) for a in kp))
    cost = pl.CostEstimate(flops=flops, transcendentals=2 * bp, bytes_accessed=bytes_accessed)

    out = pl.pallas_call(
        net_kernel,
        out_shape=jax.ShapeDtypeStruct((bp, n_pad), jnp.float32),
        grid=grid,
        in_specs=in_specs,
        out_specs=out_specs,
        compiler_params=pltpu.CompilerParams(
            dimension_semantics=("parallel",),   # shard batch tiles across TCs on v7x
            vmem_limit_bytes=32 << 20,           # realistic limit; footprint is a few MiB
        ),
        cost_estimate=cost,
    )(x, *kp)

    return out[:B, :n_out]


# -----------------------------------------------------------------------------
# Pure-JAX reference (full TransformerEncoderLayer math, unfolded, for checking)
# -----------------------------------------------------------------------------
def net_forward_ref(x, p):
    f32 = lambda a: a.astype(jnp.float32)
    h = jnp.maximum(x @ f32(p["w1"]) + p["b1"], 0.0)
    h = jnp.maximum(h @ f32(p["w2"]) + p["b2"], 0.0)

    # TransformerEncoderLayer, seq_len == 1, nhead=2, post-norm, eval-mode dropout.
    bsz, d = h.shape
    nhead, dh = 2, d // 2
    q = h @ f32(p["wq"]) + p["bq"]
    k = h @ f32(p["wk"]) + p["bk"]
    v = h @ f32(p["wv"]) + p["bv"]
    qh = q.reshape(bsz, 1, nhead, dh)
    kh = k.reshape(bsz, 1, nhead, dh)
    vh = v.reshape(bsz, 1, nhead, dh)
    scores = jnp.einsum("bqhd,bkhd->bhqk", qh, kh) / jnp.sqrt(float(dh))
    attw = jax.nn.softmax(scores, axis=-1)  # == 1.0 exactly (single key)
    av = jnp.einsum("bhqk,bkhd->bqhd", attw, vh).reshape(bsz, d)
    attn = av @ f32(p["wo"]) + p["bo"]

    s = _layernorm(h + attn, p["ln1g"], p["ln1b"])
    f = jnp.maximum(s @ f32(p["wf1"]) + p["bf1"], 0.0)
    f = f @ f32(p["wf2"]) + p["bf2"]
    s = _layernorm(s + f, p["ln2g"], p["ln2b"])
    return s @ f32(p["w3"]) + p["b3"]


if __name__ == "__main__":
    B, N_FEATURE, N_OUTPUT = 8, 32, 8

    key = jax.random.PRNGKey(0)
    kx, kparam = jax.random.split(key)
    x = jax.random.normal(kx, (B, N_FEATURE), jnp.float32)
    params = make_params(kparam, N_FEATURE, N_OUTPUT)

    out = jax.block_until_ready(net_forward(x, params))
    ref = net_forward_ref(x, params)

    assert out.shape == (B, N_OUTPUT), out.shape
    max_err = float(jnp.max(jnp.abs(out - ref)))
    assert jnp.allclose(out, ref, atol=1e-3, rtol=1e-3), max_err

    print("KERNEL_OK")
</pallas_src>

<mosaic_0001>
module attributes {stable_mosaic.version = 11 : i64} {
  func.func @net_kernel(%arg0: i32, %arg1: memref<8x32xf32, #tpu.memory_space<vmem>>, %arg2: memref<32x64xf32, #tpu.memory_space<vmem>>, %arg3: memref<1x64xf32, #tpu.memory_space<vmem>>, %arg4: memref<64x128xbf16, #tpu.memory_space<vmem>>, %arg5: memref<1x128xf32, #tpu.memory_space<vmem>>, %arg6: memref<128x128xf32, #tpu.memory_space<vmem>>, %arg7: memref<1x128xf32, #tpu.memory_space<vmem>>, %arg8: memref<1x128xf32, #tpu.memory_space<vmem>>, %arg9: memref<1x128xf32, #tpu.memory_space<vmem>>, %arg10: memref<128x2048xbf16, #tpu.memory_space<vmem>>, %arg11: memref<1x2048xf32, #tpu.memory_space<vmem>>, %arg12: memref<2048x128xbf16, #tpu.memory_space<vmem>>, %arg13: memref<1x128xf32, #tpu.memory_space<vmem>>, %arg14: memref<128x128xf32, #tpu.memory_space<vmem>>, %arg15: memref<1x128xf32, #tpu.memory_space<vmem>>, %arg16: memref<8x128xf32, #tpu.memory_space<vmem>>) attributes {dimension_semantics = [#tpu.dimension_semantics<parallel>], iteration_bounds = array<i64: 1>, scalar_prefetch = 0 : i64, scratch_operands = 0 : i64, tpu.core_type = #tpu.core_type<tc>, window_params = [{transform_indices = @transform_0, window_bounds = array<i64: 8, 32>}, {pipeline_mode = #tpu.pipeline_mode<synchronous>, transform_indices = @transform_1, window_bounds = array<i64: 32, 64>}, {pipeline_mode = #tpu.pipeline_mode<synchronous>, transform_indices = @transform_2, window_bounds = array<i64: 1, 64>}, {pipeline_mode = #tpu.pipeline_mode<synchronous>, transform_indices = @transform_3, window_bounds = array<i64: 64, 128>}, {pipeline_mode = #tpu.pipeline_mode<synchronous>, transform_indices = @transform_4, window_bounds = array<i64: 1, 128>}, {pipeline_mode = #tpu.pipeline_mode<synchronous>, transform_indices = @transform_5, window_bounds = array<i64: 128, 128>}, {pipeline_mode = #tpu.pipeline_mode<synchronous>, transform_indices = @transform_6, window_bounds = array<i64: 1, 128>}, {pipeline_mode = #tpu.pipeline_mode<synchronous>, transform_indices = @transform_7, window_bounds = array<i64: 1, 128>}, {pipeline_mode = #tpu.pipeline_mode<synchronous>, transform_indices = @transform_8, window_bounds = array<i64: 1, 128>}, {pipeline_mode = #tpu.pipeline_mode<synchronous>, transform_indices = @transform_9, window_bounds = array<i64: 128, 2048>}, {pipeline_mode = #tpu.pipeline_mode<synchronous>, transform_indices = @transform_10, window_bounds = array<i64: 1, 2048>}, {pipeline_mode = #tpu.pipeline_mode<synchronous>, transform_indices = @transform_11, window_bounds = array<i64: 2048, 128>}, {pipeline_mode = #tpu.pipeline_mode<synchronous>, transform_indices = @transform_12, window_bounds = array<i64: 1, 128>}, {pipeline_mode = #tpu.pipeline_mode<synchronous>, transform_indices = @transform_13, window_bounds = array<i64: 128, 128>}, {pipeline_mode = #tpu.pipeline_mode<synchronous>, transform_indices = @transform_14, window_bounds = array<i64: 1, 128>}, {transform_indices = @transform_15, window_bounds = array<i64: 8, 128>}]} {
    %c0 = arith.constant 0 : index
    %c0_0 = arith.constant 0 : index
    %0 = vector.load %arg1[%c0, %c0_0] : memref<8x32xf32, #tpu.memory_space<vmem>>, vector<8x32xf32>
    %c0_1 = arith.constant 0 : index
    %c0_2 = arith.constant 0 : index
    %1 = vector.load %arg2[%c0_1, %c0_2] : memref<32x64xf32, #tpu.memory_space<vmem>>, vector<32x64xf32>
    %cst = arith.constant dense<0.000000e+00> : vector<8x64xf32>
    %2 = tpu.matmul %0, %1, %cst {dimension_numbers = #tpu.dot_dimension_numbers<[1], [0], [0], [1], [0, 0, 1, 1], [], []>} : vector<8x32xf32>, vector<32x64xf32>, vector<8x64xf32> -> vector<8x64xf32>
    %c0_3 = arith.constant 0 : index
    %c0_4 = arith.constant 0 : index
    %3 = vector.load %arg3[%c0_3, %c0_4] : memref<1x64xf32, #tpu.memory_space<vmem>>, vector<1x64xf32>
    %4 = vector.broadcast %3 : vector<1x64xf32> to vector<8x64xf32>
    %5 = arith.addf %2, %4 : vector<8x64xf32>
    %cst_5 = arith.constant 0.000000e+00 : f32
    %6 = vector.broadcast %cst_5 : f32 to vector<8x64xf32>
    %7 = arith.maximumf %5, %6 : vector<8x64xf32>
    %c0_6 = arith.constant 0 : index
    %c0_7 = arith.constant 0 : index
    %8 = vector.load %arg4[%c0_6, %c0_7] : memref<64x128xbf16, #tpu.memory_space<vmem>>, vector<64x128xbf16>
    %9 = arith.extf %8 : vector<64x128xbf16> to vector<64x128xf32>
    %cst_8 = arith.constant dense<0.000000e+00> : vector<8x128xf32>
    %10 = tpu.matmul %7, %9, %cst_8 {dimension_numbers = #tpu.dot_dimension_numbers<[1], [0], [0], [1], [0, 0, 1, 1], [], []>} : vector<8x64xf32>, vector<64x128xf32>, vector<8x128xf32> -> vector<8x128xf32>
    %c0_9 = arith.constant 0 : index
    %c0_10 = arith.constant 0 : index
    %11 = vector.load %arg5[%c0_9, %c0_10] : memref<1x128xf32, #tpu.memory_space<vmem>>, vector<1x128xf32>
    %12 = vector.broadcast %11 : vector<1x128xf32> to vector<8x128xf32>
    %13 = arith.addf %10, %12 : vector<8x128xf32>
    %cst_11 = arith.constant 0.000000e+00 : f32
    %14 = vector.broadcast %cst_11 : f32 to vector<8x128xf32>
    %15 = arith.maximumf %13, %14 : vector<8x128xf32>
    %c0_12 = arith.constant 0 : index
    %c0_13 = arith.constant 0 : index
    %16 = vector.load %arg6[%c0_12, %c0_13] : memref<128x128xf32, #tpu.memory_space<vmem>>, vector<128x128xf32>
    %cst_14 = arith.constant dense<0.000000e+00> : vector<8x128xf32>
    %17 = tpu.matmul %15, %16, %cst_14 {dimension_numbers = #tpu.dot_dimension_numbers<[1], [0], [0], [1], [0, 0, 1, 1], [], []>} : vector<8x128xf32>, vector<128x128xf32>, vector<8x128xf32> -> vector<8x128xf32>
    %c0_15 = arith.constant 0 : index
    %c0_16 = arith.constant 0 : index
    %18 = vector.load %arg7[%c0_15, %c0_16] : memref<1x128xf32, #tpu.memory_space<vmem>>, vector<1x128xf32>
    %19 = vector.broadcast %18 : vector<1x128xf32> to vector<8x128xf32>
    %20 = arith.addf %17, %19 : vector<8x128xf32>
    %21 = arith.addf %15, %20 : vector<8x128xf32>
    %c0_17 = arith.constant 0 : index
    %c0_18 = arith.constant 0 : index
    %22 = vector.load %arg8[%c0_17, %c0_18] : memref<1x128xf32, #tpu.memory_space<vmem>>, vector<1x128xf32>
    %c0_19 = arith.constant 0 : index
    %c0_20 = arith.constant 0 : index
    %23 = vector.load %arg9[%c0_19, %c0_20] : memref<1x128xf32, #tpu.memory_space<vmem>>, vector<1x128xf32>
    %cst_21 = arith.constant dense<0.000000e+00> : vector<8xf32>
    %24 = vector.multi_reduction <add>, %21, %cst_21 [1] : vector<8x128xf32> to vector<8xf32>
    %25 = vector.shape_cast %24 : vector<8xf32> to vector<8x1xf32>
    %cst_22 = arith.constant 1.280000e+02 : f32
    %26 = vector.broadcast %cst_22 : f32 to vector<8x1xf32>
    %27 = arith.divf %25, %26 : vector<8x1xf32>
    %28 = vector.broadcast %27 : vector<8x1xf32> to vector<8x128xf32>
    %29 = arith.subf %21, %28 : vector<8x128xf32>
    %30 = arith.mulf %29, %29 : vector<8x128xf32>
    %cst_23 = arith.constant dense<0.000000e+00> : vector<8xf32>
    %31 = vector.multi_reduction <add>, %30, %cst_23 [1] : vector<8x128xf32> to vector<8xf32>
    %32 = vector.shape_cast %31 : vector<8xf32> to vector<8x1xf32>
    %cst_24 = arith.constant 1.280000e+02 : f32
    %33 = vector.broadcast %cst_24 : f32 to vector<8x1xf32>
    %34 = arith.divf %32, %33 : vector<8x1xf32>
    %35 = vector.broadcast %27 : vector<8x1xf32> to vector<8x128xf32>
    %36 = arith.subf %21, %35 : vector<8x128xf32>
    %cst_25 = arith.constant 9.99999974E-6 : f32
    %37 = vector.broadcast %cst_25 : f32 to vector<8x1xf32>
    %38 = arith.addf %34, %37 : vector<8x1xf32>
    %39 = math.rsqrt %38 : vector<8x1xf32>
    %40 = vector.broadcast %39 : vector<8x1xf32> to vector<8x128xf32>
    %41 = arith.mulf %36, %40 : vector<8x128xf32>
    %42 = vector.broadcast %22 : vector<1x128xf32> to vector<8x128xf32>
    %43 = arith.mulf %41, %42 : vector<8x128xf32>
    %44 = vector.broadcast %23 : vector<1x128xf32> to vector<8x128xf32>
    %45 = arith.addf %43, %44 : vector<8x128xf32>
    %c0_26 = arith.constant 0 : index
    %c0_27 = arith.constant 0 : index
    %46 = vector.load %arg10[%c0_26, %c0_27] : memref<128x2048xbf16, #tpu.memory_space<vmem>>, vector<128x2048xbf16>
    %47 = arith.extf %46 : vector<128x2048xbf16> to vector<128x2048xf32>
    %cst_28 = arith.constant dense<0.000000e+00> : vector<8x2048xf32>
    %48 = tpu.matmul %45, %47, %cst_28 {dimension_numbers = #tpu.dot_dimension_numbers<[1], [0], [0], [1], [0, 0, 1, 1], [], []>} : vector<8x128xf32>, vector<128x2048xf32>, vector<8x2048xf32> -> vector<8x2048xf32>
    %c0_29 = arith.constant 0 : index
    %c0_30 = arith.constant 0 : index
    %49 = vector.load %arg11[%c0_29, %c0_30] : memref<1x2048xf32, #tpu.memory_space<vmem>>, vector<1x2048xf32>
    %50 = vector.broadcast %49 : vector<1x2048xf32> to vector<8x2048xf32>
    %51 = arith.addf %48, %50 : vector<8x2048xf32>
    %cst_31 = arith.constant 0.000000e+00 : f32
    %52 = vector.broadcast %cst_31 : f32 to vector<8x2048xf32>
    %53 = arith.maximumf %51, %52 : vector<8x2048xf32>
    %c0_32 = arith.constant 0 : index
    %c0_33 = arith.constant 0 : index
    %54 = vector.load %arg12[%c0_32, %c0_33] : memref<2048x128xbf16, #tpu.memory_space<vmem>>, vector<2048x128xbf16>
    %55 = arith.extf %54 : vector<2048x128xbf16> to vector<2048x128xf32>
    %cst_34 = arith.constant dense<0.000000e+00> : vector<8x128xf32>
    %56 = tpu.matmul %53, %55, %cst_34 {dimension_numbers = #tpu.dot_dimension_numbers<[1], [0], [0], [1], [0, 0, 1, 1], [], []>} : vector<8x2048xf32>, vector<2048x128xf32>, vector<8x128xf32> -> vector<8x128xf32>
    %c0_35 = arith.constant 0 : index
    %c0_36 = arith.constant 0 : index
    %57 = vector.load %arg13[%c0_35, %c0_36] : memref<1x128xf32, #tpu.memory_space<vmem>>, vector<1x128xf32>
    %58 = vector.broadcast %57 : vector<1x128xf32> to vector<8x128xf32>
    %59 = arith.addf %56, %58 : vector<8x128xf32>
    %60 = arith.addf %45, %59 : vector<8x128xf32>
    %cst_37 = arith.constant dense<0.000000e+00> : vector<8xf32>
    %61 = vector.multi_reduction <add>, %60, %cst_37 [1] : vector<8x128xf32> to vector<8xf32>
    %62 = vector.shape_cast %61 : vector<8xf32> to vector<8x1xf32>
    %cst_38 = arith.constant 1.280000e+02 : f32
    %63 = vector.broadcast %cst_38 : f32 to vector<8x1xf32>
    %64 = arith.divf %62, %63 : vector<8x1xf32>
    %65 = vector.broadcast %64 : vector<8x1xf32> to vector<8x128xf32>
    %66 = arith.subf %60, %65 : vector<8x128xf32>
    %67 = arith.mulf %66, %66 : vector<8x128xf32>
    %cst_39 = arith.constant dense<0.000000e+00> : vector<8xf32>
    %68 = vector.multi_reduction <add>, %67, %cst_39 [1] : vector<8x128xf32> to vector<8xf32>
    %69 = vector.shape_cast %68 : vector<8xf32> to vector<8x1xf32>
    %cst_40 = arith.constant 1.280000e+02 : f32
    %70 = vector.broadcast %cst_40 : f32 to vector<8x1xf32>
    %71 = arith.divf %69, %70 : vector<8x1xf32>
    %72 = vector.broadcast %64 : vector<8x1xf32> to vector<8x128xf32>
    %73 = arith.subf %60, %72 : vector<8x128xf32>
    %cst_41 = arith.constant 9.99999974E-6 : f32
    %74 = vector.broadcast %cst_41 : f32 to vector<8x1xf32>
    %75 = arith.addf %71, %74 : vector<8x1xf32>
    %76 = math.rsqrt %75 : vector<8x1xf32>
    %77 = vector.broadcast %76 : vector<8x1xf32> to vector<8x128xf32>
    %78 = arith.mulf %73, %77 : vector<8x128xf32>
    %c0_42 = arith.constant 0 : index
    %c0_43 = arith.constant 0 : index
    %79 = vector.load %arg14[%c0_42, %c0_43] : memref<128x128xf32, #tpu.memory_space<vmem>>, vector<128x128xf32>
    %cst_44 = arith.constant dense<0.000000e+00> : vector<8x128xf32>
    %80 = tpu.matmul %78, %79, %cst_44 {dimension_numbers = #tpu.dot_dimension_numbers<[1], [0], [0], [1], [0, 0, 1, 1], [], []>} : vector<8x128xf32>, vector<128x128xf32>, vector<8x128xf32> -> vector<8x128xf32>
    %c0_45 = arith.constant 0 : index
    %c0_46 = arith.constant 0 : index
    %81 = vector.load %arg15[%c0_45, %c0_46] : memref<1x128xf32, #tpu.memory_space<vmem>>, vector<1x128xf32>
    %82 = vector.broadcast %81 : vector<1x128xf32> to vector<8x128xf32>
    %83 = arith.addf %80, %82 : vector<8x128xf32>
    %c0_47 = arith.constant 0 : index
    %c0_48 = arith.constant 0 : index
    %84 = vector.load %arg16[%c0_47, %c0_48] : memref<8x128xf32, #tpu.memory_space<vmem>>, vector<8x128xf32>
    tpu.vector_store %arg16[%c0_47, %c0_48], %83 {strides = array<i32>} : memref<8x128xf32, #tpu.memory_space<vmem>>, vector<8x128xf32>,
    return
  }
  func.func @transform_0(%arg0: i32) -> (i32, i32) {
    %c0_i32 = arith.constant 0 : i32
    %c0_i32_0 = arith.constant 0 : i32
    return %arg0, %c0_i32 : i32, i32
  }
  func.func @transform_1(%arg0: i32) -> (i32, i32) {
    %c0_i32 = arith.constant 0 : i32
    %c0_i32_0 = arith.constant 0 : i32
    %c0_i32_1 = arith.constant 0 : i32
    return %c0_i32, %c0_i32_0 : i32, i32
  }
  func.func @transform_2(%arg0: i32) -> (i32, i32) {
    %c0_i32 = arith.constant 0 : i32
    %c0_i32_0 = arith.constant 0 : i32
    %c0_i32_1 = arith.constant 0 : i32
    return %c0_i32, %c0_i32_0 : i32, i32
  }
  func.func @transform_3(%arg0: i32) -> (i32, i32) {
    %c0_i32 = arith.constant 0 : i32
    %c0_i32_0 = arith.constant 0 : i32
    %c0_i32_1 = arith.constant 0 : i32
    return %c0_i32, %c0_i32_0 : i32, i32
  }
  func.func @transform_4(%arg0: i32) -> (i32, i32) {
    %c0_i32 = arith.constant 0 : i32
    %c0_i32_0 = arith.constant 0 : i32
    %c0_i32_1 = arith.constant 0 : i32
    return %c0_i32, %c0_i32_0 : i32, i32
  }
  func.func @transform_5(%arg0: i32) -> (i32, i32) {
    %c0_i32 = arith.constant 0 : i32
    %c0_i32_0 = arith.constant 0 : i32
    %c0_i32_1 = arith.constant 0 : i32
    return %c0_i32, %c0_i32_0 : i32, i32
  }
  func.func @transform_6(%arg0: i32) -> (i32, i32) {
    %c0_i32 = arith.constant 0 : i32
    %c0_i32_0 = arith.constant 0 : i32
    %c0_i32_1 = arith.constant 0 : i32
    return %c0_i32, %c0_i32_0 : i32, i32
  }
  func.func @transform_7(%arg0: i32) -> (i32, i32) {
    %c0_i32 = arith.constant 0 : i32
    %c0_i32_0 = arith.constant 0 : i32
    %c0_i32_1 = arith.constant 0 : i32
    return %c0_i32, %c0_i32_0 : i32, i32
  }
  func.func @transform_8(%arg0: i32) -> (i32, i32) {
    %c0_i32 = arith.constant 0 : i32
    %c0_i32_0 = arith.constant 0 : i32
    %c0_i32_1 = arith.constant 0 : i32
    return %c0_i32, %c0_i32_0 : i32, i32
  }
  func.func @transform_9(%arg0: i32) -> (i32, i32) {
    %c0_i32 = arith.constant 0 : i32
    %c0_i32_0 = arith.constant 0 : i32
    %c0_i32_1 = arith.constant 0 : i32
    return %c0_i32, %c0_i32_0 : i32, i32
  }
  func.func @transform_10(%arg0: i32) -> (i32, i32) {
    %c0_i32 = arith.constant 0 : i32
    %c0_i32_0 = arith.constant 0 : i32
    %c0_i32_1 = arith.constant 0 : i32
    return %c0_i32, %c0_i32_0 : i32, i32
  }
  func.func @transform_11(%arg0: i32) -> (i32, i32) {
    %c0_i32 = arith.constant 0 : i32
    %c0_i32_0 = arith.constant 0 : i32
    %c0_i32_1 = arith.constant 0 : i32
    return %c0_i32, %c0_i32_0 : i32, i32
  }
  func.func @transform_12(%arg0: i32) -> (i32, i32) {
    %c0_i32 = arith.constant 0 : i32
    %c0_i32_0 = arith.constant 0 : i32
    %c0_i32_1 = arith.constant 0 : i32
    return %c0_i32, %c0_i32_0 : i32, i32
  }
  func.func @transform_13(%arg0: i32) -> (i32, i32) {
    %c0_i32 = arith.constant 0 : i32
    %c0_i32_0 = arith.constant 0 : i32
    %c0_i32_1 = arith.constant 0 : i32
    return %c0_i32, %c0_i32_0 : i32, i32
  }
  func.func @transform_14(%arg0: i32) -> (i32, i32) {
    %c0_i32 = arith.constant 0 : i32
    %c0_i32_0 = arith.constant 0 : i32
    %c0_i32_1 = arith.constant 0 : i32
    return %c0_i32, %c0_i32_0 : i32, i32
  }
  func.func @transform_15(%arg0: i32) -> (i32, i32) {
    %c0_i32 = arith.constant 0 : i32
    %c0_i32_0 = arith.constant 0 : i32
    return %arg0, %c0_i32 : i32, i32
  }
}

</mosaic_0001>

<llo_original>
// kernel: net_forward.1
$region0: #{net_forward.1}
  #allocation0 [shape = 'u32[]', space=smem, size = 0x4, offset = 0x4, fixed_abs, tag = 'smem constant byte address 0x4 - core index']
  #allocation1 [shape = 'u32[144,128]{1,0:T(1,128)}', space=vmem, size = 0x12000, scoped, tag = 'internal scratch']
  %s0 = inlined_call_operand.vmem [shape: f32[8,32], index: 0, kind: input, shape index: {}]
  %s1 = inlined_call_operand.vmem [shape: f32[32,64], index: 1, kind: input, shape index: {}]
  %s2 = inlined_call_operand.vmem [shape: f32[1,64], index: 2, kind: input, shape index: {}]
  %s3 = inlined_call_operand.vmem [shape: bf16[64,128], index: 3, kind: input, shape index: {}]
  %s4 = inlined_call_operand.vmem [shape: f32[1,128], index: 4, kind: input, shape index: {}]
  %s5 = inlined_call_operand.vmem [shape: f32[128,128], index: 5, kind: input, shape index: {}]
  %s6 = inlined_call_operand.vmem [shape: f32[1,128], index: 6, kind: input, shape index: {}]
  %s7 = inlined_call_operand.vmem [shape: f32[1,128], index: 7, kind: input, shape index: {}]
  %s8 = inlined_call_operand.vmem [shape: f32[1,128], index: 8, kind: input, shape index: {}]
  %s9 = inlined_call_operand.vmem [shape: bf16[128,2048], index: 9, kind: input, shape index: {}]
  %s10 = inlined_call_operand.vmem [shape: f32[1,2048], index: 10, kind: input, shape index: {}]
  %s11 = inlined_call_operand.hbm [shape: bf16[2048,128], index: 11, kind: input, shape index: {}]
  %s12 = inlined_call_operand.vmem [shape: f32[1,128], index: 12, kind: input, shape index: {}]
  %s13 = inlined_call_operand.vmem [shape: f32[128,128], index: 13, kind: input, shape index: {}]
  %s14 = inlined_call_operand.vmem [shape: f32[1,128], index: 14, kind: input, shape index: {}]
  %s15 = inlined_call_operand.hbm [shape: f32[8,128], index: 15, kind: output, shape index: {}]
  %s16 = sld [smem:[#allocation0]]
  $region74: #{net_forward.1} parent=0
    _
  %s18 = ssub.s32 1, %s16
  %s19 = scalar_select 0, %s18, %s16
  $region1: #{net_forward.1} parent=0
    #allocation2 [shape = 'u8[524288]{0}', space=vmem, size = 0x80000, scoped, tag = 'input window, operand 11, single buffered']
    #allocation3 [shape = 's32[1]{0}', space=sflag, size = 0x4, scoped, tag = 'scoped memory for net_forward.1']
    #allocation4 [shape = 's32[1]{0}', space=sflag, size = 0x4, scoped, tag = 'scoped memory for net_forward.1']
    #allocation5 [shape = 'u8[4096]{0}', space=vmem, size = 0x1000, scoped, tag = 'output window, operand 0, single buffered']
    %20 = vsyncpa [#allocation3], 0
    %21 = vsyncpa [#allocation4], 0
    // Predicated region
    $region2: #{net_forward.1} parent=1 // pred_check
      _
    $region3: #{net_forward.1} parent=1 // pred_check_branch
      %23 = sbr.rel (0) target = $region5
    $region4: #{net_forward.1} parent=1 // pred_region
      _
    $region5: #{net_forward.1} parent=1 // pred_fallthru
      _
    // Predicated region
    $region6: #{net_forward.1} parent=1 // pred_check
      _
    $region7: #{net_forward.1} parent=1 // pred_check_branch
      %25 = sbr.rel (0) target = $region9
    $region8: #{net_forward.1} parent=1 // pred_region
      _
    $region9: #{net_forward.1} parent=1 // pred_fallthru
      _
    // Predicated region
    $region10: #{net_forward.1} parent=1 // pred_check
      _
    $region11: #{net_forward.1} parent=1 // pred_check_branch
      %27 = sbr.rel (0) target = $region13
    $region12: #{net_forward.1} parent=1 // pred_region
      _
    $region13: #{net_forward.1} parent=1 // pred_fallthru
      _
    // Predicated region
    $region14: #{net_forward.1} parent=1 // pred_check
      _
    $region15: #{net_forward.1} parent=1 // pred_check_branch
      %29 = sbr.rel (0) target = $region17
    $region16: #{net_forward.1} parent=1 // pred_region
      _
    $region17: #{net_forward.1} parent=1 // pred_fallthru
      _
    // Predicated region
    $region18: #{net_forward.1} parent=1 // pred_check
      _
    $region19: #{net_forward.1} parent=1 // pred_check_branch
      %31 = sbr.rel (0) target = $region21
    $region20: #{net_forward.1} parent=1 // pred_region
      _
    $region21: #{net_forward.1} parent=1 // pred_fallthru
      _
    // Predicated region
    $region22: #{net_forward.1} parent=1 // pred_check
      _
    $region23: #{net_forward.1} parent=1 // pred_check_branch
      %33 = sbr.rel (0) target = $region25
    $region24: #{net_forward.1} parent=1 // pred_region
      _
    $region25: #{net_forward.1} parent=1 // pred_fallthru
      _
    // Predicated region
    $region26: #{net_forward.1} parent=1 // pred_check
      _
    $region27: #{net_forward.1} parent=1 // pred_check_branch
      %35 = sbr.rel (0) target = $region29
    $region28: #{net_forward.1} parent=1 // pred_region
      _
    $region29: #{net_forward.1} parent=1 // pred_fallthru
      _
    // Predicated region
    $region30: #{net_forward.1} parent=1 // pred_check
      _
    $region31: #{net_forward.1} parent=1 // pred_check_branch
      %37 = sbr.rel (0) target = $region33
    $region32: #{net_forward.1} parent=1 // pred_region
      _
    $region33: #{net_forward.1} parent=1 // pred_fallthru
      _
    // Predicated region
    $region34: #{net_forward.1} parent=1 // pred_check
      _
    $region35: #{net_forward.1} parent=1 // pred_check_branch
      %39 = sbr.rel (0) target = $region37
    $region36: #{net_forward.1} parent=1 // pred_region
      _
    $region37: #{net_forward.1} parent=1 // pred_fallthru
      _
    // Predicated region
    $region38: #{net_forward.1} parent=1 // pred_check
      _
    $region39: #{net_forward.1} parent=1 // pred_check_branch
      %41 = sbr.rel (0) target = $region41
    $region40: #{net_forward.1} parent=1 // pred_region
      _
    $region41: #{net_forward.1} parent=1 // pred_fallthru
      _
    // Predicated region
    $region42: #{net_forward.1} parent=1 // pred_check
      _
    $region43: #{net_forward.1} parent=1 // pred_check_branch
      %43 = sbr.rel (0) target = $region45
    $region44: #{net_forward.1} parent=1 // pred_region
      _
    $region45: #{net_forward.1} parent=1 // pred_fallthru
      _
    // Predicated region
    $region46: #{net_forward.1} parent=1 // pred_check
      _
    $region47: #{net_forward.1} parent=1 // pred_check_branch
      %45 = sbr.rel (0) target = $region49
    $region48: #{net_forward.1} parent=1 // pred_region
      %s47 = ssub.s32 16384, 16384
      %48 = vsyncadd [#allocation3], %s47
      %s49 = sshll.u32 [#allocation2], 4
      %s50 = int_to_ptr.vmem [resolvable:$true] %s49
      %55 = dma.hbm_to_vmem [thread:$0]  %s11, 16384, %s50, [#allocation3], 64, 64, 4
    $region49: #{net_forward.1} parent=1 // pred_fallthru
      _
    // Predicated region
    $region50: #{net_forward.1} parent=1 // pred_check
      _
    $region51: #{net_forward.1} parent=1 // pred_check_branch
      %57 = sbr.rel (0) target = $region53
    $region52: #{net_forward.1} parent=1 // pred_region
      _
    $region53: #{net_forward.1} parent=1 // pred_fallthru
      _
    // Predicated region
    $region54: #{net_forward.1} parent=1 // pred_check
      _
    $region55: #{net_forward.1} parent=1 // pred_check_branch
      %59 = sbr.rel (0) target = $region57
    $region56: #{net_forward.1} parent=1 // pred_region
      _
    $region57: #{net_forward.1} parent=1 // pred_fallthru
      _
    // Predicated region
    $region58: #{net_forward.1} parent=1 // pred_check
      _
    $region59: #{net_forward.1} parent=1 // pred_check_branch
      %61 = sbr.rel (0) target = $region61
    $region60: #{net_forward.1} parent=1 // pred_region
      _
    $region61: #{net_forward.1} parent=1 // pred_fallthru
      _
    // Predicated region
    $region62: #{net_forward.1} parent=1 // pred_check
      _
    $region63: #{net_forward.1} parent=1 // pred_check_branch
      %63 = sbr.rel (0) target = $region65
    $region64: #{net_forward.1} parent=1 // pred_region
      %64 = dma.done [#allocation3], 16384
    $region65: #{net_forward.1} parent=1 // pred_fallthru
      _
    %v65 = vld [vmem:[%s0] sm:$0xff]
    %v66 = vld [vmem:[%s1] sm:$0xff]
    %v67 = vld [vmem:[%s1 + $0x8] sm:$0xff]
    %v68 = vld [vmem:[%s1 + $0x10] sm:$0xff]
    %v69 = vld [vmem:[%s1 + $0x18] sm:$0xff]
    %v70 = vld [vmem:[%s2] sm:$0x1]
    %v72 = vlaneseq
    %v73 = vshrl.u32 %v72, 7
    %v74 = vsub.s32 0, %v73
    %v75 = vrot.slane %v70, %v74
    %vm77 = vcmask 261120
    %v79 = vsel %vm77, %v65, 0
    %81 = vmatprep.subr.mxu0 0.0
    %82 = vmatpush1.msra.mxu0 %v66
    %83 = vmatprep.subr.mxu0 0.0
    %84 = vmatpush1.msra.mxu0 %v67
    %85 = vmatprep.subr.mxu0 0.0
    %86 = vmatpush1.msra.mxu0 %v68
    %87 = vmatprep.subr.mxu0 0.0
    %88 = vmatpush1.msra.mxu0 %v69
    %89 = vmatprep.subr.mxu0 0.0
    %90 = vmatpush1.msra.mxu0 0.0
    %91 = vmatprep.subr.mxu0 0.0
    %92 = vmatpush1.msra.mxu0 0.0
    %93 = vmatprep.subr.mxu0 0.0
    %94 = vmatpush1.msra.mxu0 0.0
    %95 = vmatprep.subr.mxu0 0.0
    %96 = vmatpush1.msra.mxu0 0.0
    %97 = vmatprep.subr.mxu0 0.0
    %98 = vmatpush1.msra.mxu0 0.0
    %99 = vmatprep.subr.mxu0 0.0
    %100 = vmatpush1.msra.mxu0 0.0
    %101 = vmatprep.subr.mxu0 0.0
    %102 = vmatpush1.msra.mxu0 0.0
    %103 = vmatprep.subr.mxu0 0.0
    %104 = vmatpush1.msra.mxu0 0.0
    %105 = vmatprep.subr.mxu0 0.0
    %106 = vmatpush1.msra.mxu0 0.0
    %107 = vmatprep.subr.mxu0 0.0
    %108 = vmatpush1.msra.mxu0 0.0
    %109 = vmatprep.subr.mxu0 0.0
    %110 = vmatpush1.msra.mxu0 0.0
    %111 = vmatprep.subr.mxu0 0.0
    %112 = vmatpush1.msra.mxu0 0.0
    %113 = vmatprep.subr.mxu0 0.0
    %114 = vmatpush1.msra.mxu0 0.0
    %115 = vmatprep.subr.mxu0 0.0
    %116 = vmatpush1.msra.mxu0 0.0
    %117 = vmatprep.subr.mxu0 0.0
    %118 = vmatpush1.msra.mxu0 0.0
    %119 = vmatprep.subr.mxu0 0.0
    %120 = vmatpush1.msra.mxu0 0.0
    %121 = vmatprep.subr.mxu0 0.0
    %122 = vmatpush1.msra.mxu0 0.0
    %123 = vmatprep.subr.mxu0 0.0
    %124 = vmatpush1.msra.mxu0 0.0
    %125 = vmatprep.subr.mxu0 0.0
    %126 = vmatpush1.msra.mxu0 0.0
    %127 = vmatprep.subr.mxu0 0.0
    %128 = vmatpush1.msra.mxu0 0.0
    %129 = vmatprep.subr.mxu0 0.0
    %130 = vmatpush1.msra.mxu0 0.0
    %131 = vmatprep.subr.mxu0 0.0
    %132 = vmatpush1.msra.mxu0 0.0
    %133 = vmatprep.subr.mxu0 0.0
    %134 = vmatpush1.msra.mxu0 0.0
    %135 = vmatprep.subr.mxu0 0.0
    %136 = vmatpush1.msra.mxu0 0.0
    %137 = vmatprep.subr.mxu0 0.0
    %138 = vmatpush1.msra.mxu0 0.0
    %139 = vmatprep.subr.mxu0 0.0
    %140 = vmatpush1.msra.mxu0 0.0
    %141 = vmatprep.subr.mxu0 0.0
    %142 = vmatpush1.msra.mxu0 0.0
    %143 = vmatprep.subr.mxu0 0.0
    %144 = vmatpush1.msra.mxu0 0.0
    %145 = vmatprep.mubr.f32.mxu0 0.0
    %146 = vmatmul.mubr.f32.gmra.mrb[0].mxu0 %v79
    %v147 = vpop.f32.mrb[0].mxu0
    %v148 = vadd.f32 %v75, %v147
    %v149 = vpop.f32.mrb[0].mxu0
    %150 = vdwg.mxu0
    %v151 = vmax.f32 %v148, 0.0
    %v152 = vld [vmem:[%s3] sm:$0xf]
    %v153 = vld [vmem:[%s3 + $0x4] sm:$0xf]
    %v154 = vld [vmem:[%s3 + $0x8] sm:$0xf]
    %v155 = vld [vmem:[%s3 + $0xc] sm:$0xf]
    %v156 = vld [vmem:[%s3 + $0x10] sm:$0xf]
    %v157 = vld [vmem:[%s3 + $0x14] sm:$0xf]
    %v158 = vld [vmem:[%s3 + $0x18] sm:$0xf]
    %v159 = vld [vmem:[%s3 + $0x1c] sm:$0xf]
    %v160 = vunpack.c.l.bf16 %v152
    %v161 = vunpack.c.l.bf16 %v153
    %v162 = vunpack.c.l.bf16 %v154
    %v163 = vunpack.c.l.bf16 %v155
    %v164 = vunpack.c.l.bf16 %v156
    %v165 = vunpack.c.l.bf16 %v157
    %v166 = vunpack.c.l.bf16 %v158
    %v167 = vunpack.c.l.bf16 %v159
    %v168 = vld [vmem:[%s4] sm:$0x1]
    %v170 = vlaneseq
    %v171 = vshrl.u32 %v170, 7
    %v172 = vsub.s32 0, %v171
    %v173 = vrot.slane %v168, %v172
    %vm175 = vcmask 523264
    %v177 = vsel %vm175, %v151, 0
    %179 = vmatprep.subr.mxu0 0.0
    %180 = vmatpush1.msra.mxu0 %v160
    %181 = vmatprep.subr.mxu0 0.0
    %182 = vmatpush1.msra.mxu0 %v161
    %183 = vmatprep.subr.mxu0 0.0
    %184 = vmatpush1.msra.mxu0 %v162
    %185 = vmatprep.subr.mxu0 0.0
    %186 = vmatpush1.msra.mxu0 %v163
    %187 = vmatprep.subr.mxu0 0.0
    %188 = vmatpush1.msra.mxu0 %v164
    %189 = vmatprep.subr.mxu0 0.0
    %190 = vmatpush1.msra.mxu0 %v165
    %191 = vmatprep.subr.mxu0 0.0
    %192 = vmatpush1.msra.mxu0 %v166
    %193 = vmatprep.subr.mxu0 0.0
    %194 = vmatpush1.msra.mxu0 %v167
    %195 = vmatprep.subr.mxu0 0.0
    %196 = vmatpush1.msra.mxu0 0.0
    %197 = vmatprep.subr.mxu0 0.0
    %198 = vmatpush1.msra.mxu0 0.0
    %199 = vmatprep.subr.mxu0 0.0
    %200 = vmatpush1.msra.mxu0 0.0
    %201 = vmatprep.subr.mxu0 0.0
    %202 = vmatpush1.msra.mxu0 0.0
    %203 = vmatprep.subr.mxu0 0.0
    %204 = vmatpush1.msra.mxu0 0.0
    %205 = vmatprep.subr.mxu0 0.0
    %206 = vmatpush1.msra.mxu0 0.0
    %207 = vmatprep.subr.mxu0 0.0
    %208 = vmatpush1.msra.mxu0 0.0
    %209 = vmatprep.subr.mxu0 0.0
    %210 = vmatpush1.msra.mxu0 0.0
    %211 = vmatprep.subr.mxu0 0.0
    %212 = vmatpush1.msra.mxu0 0.0
    %213 = vmatprep.subr.mxu0 0.0
    %214 = vmatpush1.msra.mxu0 0.0
    %215 = vmatprep.subr.mxu0 0.0
    %216 = vmatpush1.msra.mxu0 0.0
    %217 = vmatprep.subr.mxu0 0.0
    %218 = vmatpush1.msra.mxu0 0.0
    %219 = vmatprep.subr.mxu0 0.0
    %220 = vmatpush1.msra.mxu0 0.0
    %221 = vmatprep.subr.mxu0 0.0
    %222 = vmatpush1.msra.mxu0 0.0
    %223 = vmatprep.subr.mxu0 0.0
    %224 = vmatpush1.msra.mxu0 0.0
    %225 = vmatprep.subr.mxu0 0.0
    %226 = vmatpush1.msra.mxu0 0.0
    %227 = vmatprep.subr.mxu0 0.0
    %228 = vmatpush1.msra.mxu0 0.0
    %229 = vmatprep.subr.mxu0 0.0
    %230 = vmatpush1.msra.mxu0 0.0
    %231 = vmatprep.subr.mxu0 0.0
    %232 = vmatpush1.msra.mxu0 0.0
    %233 = vmatprep.subr.mxu0 0.0
    %234 = vmatpush1.msra.mxu0 0.0
    %235 = vmatprep.subr.mxu0 0.0
    %236 = vmatpush1.msra.mxu0 0.0
    %237 = vmatprep.subr.mxu0 0.0
    %238 = vmatpush1.msra.mxu0 0.0
    %239 = vmatprep.subr.mxu0 0.0
    %240 = vmatpush1.msra.mxu0 0.0
    %241 = vmatprep.subr.mxu0 0.0
    %242 = vmatpush1.msra.mxu0 0.0
    %243 = vmatprep.mubr.f32.mxu0 0.0
    %244 = vmatmul.mubr.f32.gmra.mrb[0].mxu0 %v177
    %v245 = vpop.f32.mrb[0].mxu0
    %v246 = vadd.f32 %v173, %v245
    %v247 = vpop.f32.mrb[0].mxu0
    %248 = vdwg.mxu0
    %v249 = vmax.f32 %v246, 0.0
    %v250 = vld [vmem:[%s5] sm:$0xff]
    %v251 = vld [vmem:[%s5 + $0x8] sm:$0xff]
    %v252 = vld [vmem:[%s5 + $0x10] sm:$0xff]
    %v253 = vld [vmem:[%s5 + $0x18] sm:$0xff]
    %v254 = vld [vmem:[%s5 + $0x20] sm:$0xff]
    %v255 = vld [vmem:[%s5 + $0x28] sm:$0xff]
    %v256 = vld [vmem:[%s5 + $0x30] sm:$0xff]
    %v257 = vld [vmem:[%s5 + $0x38] sm:$0xff]
    %v258 = vld [vmem:[%s5 + $0x40] sm:$0xff]
    %v259 = vld [vmem:[%s5 + $0x48] sm:$0xff]
    %v260 = vld [vmem:[%s5 + $0x50] sm:$0xff]
    %v261 = vld [vmem:[%s5 + $0x58] sm:$0xff]
    %v262 = vld [vmem:[%s5 + $0x60] sm:$0xff]
    %v263 = vld [vmem:[%s5 + $0x68] sm:$0xff]
    %v264 = vld [vmem:[%s5 + $0x70] sm:$0xff]
    %v265 = vld [vmem:[%s5 + $0x78] sm:$0xff]
    %v266 = vld [vmem:[%s6] sm:$0x1]
    %v268 = vlaneseq
    %v269 = vshrl.u32 %v268, 7
    %v270 = vsub.s32 0, %v269
    %v271 = vrot.slane %v266, %v270
    %273 = vmatprep.subr.mxu0 0.0
    %274 = vmatpush1.msra.mxu0 %v250
    %275 = vmatprep.subr.mxu0 0.0
    %276 = vmatpush1.msra.mxu0 %v251
    %277 = vmatprep.subr.mxu0 0.0
    %278 = vmatpush1.msra.mxu0 %v252
    %279 = vmatprep.subr.mxu0 0.0
    %280 = vmatpush1.msra.mxu0 %v253
    %281 = vmatprep.subr.mxu0 0.0
    %282 = vmatpush1.msra.mxu0 %v254
    %283 = vmatprep.subr.mxu0 0.0
    %284 = vmatpush1.msra.mxu0 %v255
    %285 = vmatprep.subr.mxu0 0.0
    %286 = vmatpush1.msra.mxu0 %v256
    %287 = vmatprep.subr.mxu0 0.0
    %288 = vmatpush1.msra.mxu0 %v257
    %289 = vmatprep.subr.mxu0 0.0
    %290 = vmatpush1.msra.mxu0 %v258
    %291 = vmatprep.subr.mxu0 0.0
    %292 = vmatpush1.msra.mxu0 %v259
    %293 = vmatprep.subr.mxu0 0.0
    %294 = vmatpush1.msra.mxu0 %v260
    %295 = vmatprep.subr.mxu0 0.0
    %296 = vmatpush1.msra.mxu0 %v261
    %297 = vmatprep.subr.mxu0 0.0
    %298 = vmatpush1.msra.mxu0 %v262
    %299 = vmatprep.subr.mxu0 0.0
    %300 = vmatpush1.msra.mxu0 %v263
    %301 = vmatprep.subr.mxu0 0.0
    %302 = vmatpush1.msra.mxu0 %v264
    %303 = vmatprep.subr.mxu0 0.0
    %304 = vmatpush1.msra.mxu0 %v265
    %305 = vmatprep.subr.mxu0 0.0
    %306 = vmatpush1.msra.mxu0 0.0
    %307 = vmatprep.subr.mxu0 0.0
    %308 = vmatpush1.msra.mxu0 0.0
    %309 = vmatprep.subr.mxu0 0.0
    %310 = vmatpush1.msra.mxu0 0.0
    %311 = vmatprep.subr.mxu0 0.0
    %312 = vmatpush1.msra.mxu0 0.0
    %313 = vmatprep.subr.mxu0 0.0
    %314 = vmatpush1.msra.mxu0 0.0
    %315 = vmatprep.subr.mxu0 0.0
    %316 = vmatpush1.msra.mxu0 0.0
    %317 = vmatprep.subr.mxu0 0.0
    %318 = vmatpush1.msra.mxu0 0.0
    %319 = vmatprep.subr.mxu0 0.0
    %320 = vmatpush1.msra.mxu0 0.0
    %321 = vmatprep.subr.mxu0 0.0
    %322 = vmatpush1.msra.mxu0 0.0
    %323 = vmatprep.subr.mxu0 0.0
    %324 = vmatpush1.msra.mxu0 0.0
    %325 = vmatprep.subr.mxu0 0.0
    %326 = vmatpush1.msra.mxu0 0.0
    %327 = vmatprep.subr.mxu0 0.0
    %328 = vmatpush1.msra.mxu0 0.0
    %329 = vmatprep.subr.mxu0 0.0
    %330 = vmatpush1.msra.mxu0 0.0
    %331 = vmatprep.subr.mxu0 0.0
    %332 = vmatpush1.msra.mxu0 0.0
    %333 = vmatprep.subr.mxu0 0.0
    %334 = vmatpush1.msra.mxu0 0.0
    %335 = vmatprep.subr.mxu0 0.0
    %336 = vmatpush1.msra.mxu0 0.0
    %337 = vmatprep.mubr.f32.mxu0 0.0
    %338 = vmatmul.mubr.f32.gmra.mrb[0].mxu0 %v249
    %v339 = vpop.f32.mrb[0].mxu0
    %v340 = vadd.f32 %v271, %v339
    %v341 = vpop.f32.mrb[0].mxu0
    %342 = vdwg.mxu0
    %v343 = vadd.f32 %v249, %v340
    %v344 = vld [vmem:[%s7] sm:$0x1]
    %v345 = vld [vmem:[%s8] sm:$0x1]
    %346 = vadd.xlane.f32.xlu0 %v343
    %v347 = vpop.xlane.xlu0 %346
    %v348 = vrcp.pop 128.0
    %v349 = vmul.f32 %v347, %v348
    %v350 = vsub.f32 %v343, %v349
    %v351 = vmul.f32 %v350, %v350
    %352 = vadd.xlane.f32.xlu0 %v351
    %v353 = vpop.xlane.xlu0 %352
    %v354 = vmul.f32 %v353, %v348
    %v355 = vadd.f32 %v354, 1e-05
    %v356 = vrsqrt.pop %v355
    %v357 = vmul.f32 %v350, %v356
    %v359 = vlaneseq
    %v360 = vshrl.u32 %v359, 7
    %v361 = vsub.s32 0, %v360
    %v362 = vrot.slane %v344, %v361
    %v364 = vmul.f32 %v357, %v362
    %v366 = vlaneseq
    %v367 = vshrl.u32 %v366, 7
    %v368 = vsub.s32 0, %v367
    %v369 = vrot.slane %v345, %v368
    %v371 = vadd.f32 %v364, %v369
    %v372 = vld [vmem:[%s9] sm:$0xff]
    %v373 = vld [vmem:[%s9 + $0x8] sm:$0xff]
    %v374 = vld [vmem:[%s9 + $0x10] sm:$0xff]
    %v375 = vld [vmem:[%s9 + $0x18] sm:$0xff]
    %v376 = vld [vmem:[%s9 + $0x20] sm:$0xff]
    %v377 = vld [vmem:[%s9 + $0x28] sm:$0xff]
    %v378 = vld [vmem:[%s9 + $0x30] sm:$0xff]
    %v379 = vld [vmem:[%s9 + $0x38] sm:$0xff]
    %v380 = vld [vmem:[%s9 + $0x40] sm:$0xff]
    %v381 = vld [vmem:[%s9 + $0x48] sm:$0xff]
    %v382 = vld [vmem:[%s9 + $0x50] sm:$0xff]
    %v383 = vld [vmem:[%s9 + $0x58] sm:$0xff]
    %v384 = vld [vmem:[%s9 + $0x60] sm:$0xff]
    %v385 = vld [vmem:[%s9 + $0x68] sm:$0xff]
    %v386 = vld [vmem:[%s9 + $0x70] sm:$0xff]
    %v387 = vld [vmem:[%s9 + $0x78] sm:$0xff]
    %v388 = vld [vmem:[%s9 + $0x80] sm:$0xff]
    %v389 = vld [vmem:[%s9 + $0x88] sm:$0xff]
    %v390 = vld [vmem:[%s9 + $0x90] sm:$0xff]
    %v391 = vld [vmem:[%s9 + $0x98] sm:$0xff]
    %v392 = vld [vmem:[%s9 + $0xa0] sm:$0xff]
    %v393 = vld [vmem:[%s9 + $0xa8] sm:$0xff]
    %v394 = vld [vmem:[%s9 + $0xb0] sm:$0xff]
    %v395 = vld [vmem:[%s9 + $0xb8] sm:$0xff]
    %v396 = vld [vmem:[%s9 + $0xc0] sm:$0xff]
    %v397 = vld [vmem:[%s9 + $0xc8] sm:$0xff]
    %v398 = vld [vmem:[%s9 + $0xd0] sm:$0xff]
    %v399 = vld [vmem:[%s9 + $0xd8] sm:$0xff]
    %v400 = vld [vmem:[%s9 + $0xe0] sm:$0xff]
    %v401 = vld [vmem:[%s9 + $0xe8] sm:$0xff]
    %v402 = vld [vmem:[%s9 + $0xf0] sm:$0xff]
    %v403 = vld [vmem:[%s9 + $0xf8] sm:$0xff]
    %v404 = vld [vmem:[%s9 + $0x100] sm:$0xff]
    %v405 = vld [vmem:[%s9 + $0x108] sm:$0xff]
    %v406 = vld [vmem:[%s9 + $0x110] sm:$0xff]
    %v407 = vld [vmem:[%s9 + $0x118] sm:$0xff]
    %v408 = vld [vmem:[%s9 + $0x120] sm:$0xff]
    %v409 = vld [vmem:[%s9 + $0x128] sm:$0xff]
    %v410 = vld [vmem:[%s9 + $0x130] sm:$0xff]
    %v411 = vld [vmem:[%s9 + $0x138] sm:$0xff]
    %v412 = vld [vmem:[%s9 + $0x140] sm:$0xff]
    %v413 = vld [vmem:[%s9 + $0x148] sm:$0xff]
    %v414 = vld [vmem:[%s9 + $0x150] sm:$0xff]
    %v415 = vld [vmem:[%s9 + $0x158] sm:$0xff]
    %v416 = vld [vmem:[%s9 + $0x160] sm:$0xff]
    %v417 = vld [vmem:[%s9 + $0x168] sm:$0xff]
    %v418 = vld [vmem:[%s9 + $0x170] sm:$0xff]
    %v419 = vld [vmem:[%s9 + $0x178] sm:$0xff]
    %v420 = vld [vmem:[%s9 + $0x180] sm:$0xff]
    %v421 = vld [vmem:[%s9 + $0x188] sm:$0xff]
    %v422 = vld [vmem:[%s9 + $0x190] sm:$0xff]
    %v423 = vld [vmem:[%s9 + $0x198] sm:$0xff]
    %v424 = vld [vmem:[%s9 + $0x1a0] sm:$0xff]
    %v425 = vld [vmem:[%s9 + $0x1a8] sm:$0xff]
    %v426 = vld [vmem:[%s9 + $0x1b0] sm:$0xff]
    %v427 = vld [vmem:[%s9 + $0x1b8] sm:$0xff]
    %v428 = vld [vmem:[%s9 + $0x1c0] sm:$0xff]
    %v429 = vld [vmem:[%s9 + $0x1c8] sm:$0xff]
    %v430 = vld [vmem:[%s9 + $0x1d0] sm:$0xff]
    %v431 = vld [vmem:[%s9 + $0x1d8] sm:$0xff]
    %v432 = vld [vmem:[%s9 + $0x1e0] sm:$0xff]
    %v433 = vld [vmem:[%s9 + $0x1e8] sm:$0xff]
    %v434 = vld [vmem:[%s9 + $0x1f0] sm:$0xff]
    %v435 = vld [vmem:[%s9 + $0x1f8] sm:$0xff]
    %v436 = vld [vmem:[%s9 + $0x200] sm:$0xff]
    %v437 = vld [vmem:[%s9 + $0x208] sm:$0xff]
    %v438 = vld [vmem:[%s9 + $0x210] sm:$0xff]
    %v439 = vld [vmem:[%s9 + $0x218] sm:$0xff]
    %v440 = vld [vmem:[%s9 + $0x220] sm:$0xff]
    %v441 = vld [vmem:[%s9 + $0x228] sm:$0xff]
    %v442 = vld [vmem:[%s9 + $0x230] sm:$0xff]
    %v443 = vld [vmem:[%s9 + $0x238] sm:$0xff]
    %v444 = vld [vmem:[%s9 + $0x240] sm:$0xff]
    %v445 = vld [vmem:[%s9 + $0x248] sm:$0xff]
    %v446 = vld [vmem:[%s9 + $0x250] sm:$0xff]
    %v447 = vld [vmem:[%s9 + $0x258] sm:$0xff]
    %v448 = vld [vmem:[%s9 + $0x260] sm:$0xff]
    %v449 = vld [vmem:[%s9 + $0x268] sm:$0xff]
    %v450 = vld [vmem:[%s9 + $0x270] sm:$0xff]
    %v451 = vld [vmem:[%s9 + $0x278] sm:$0xff]
    %v452 = vld [vmem:[%s9 + $0x280] sm:$0xff]
    %v453 = vld [vmem:[%s9 + $0x288] sm:$0xff]
    %v454 = vld [vmem:[%s9 + $0x290] sm:$0xff]
    %v455 = vld [vmem:[%s9 + $0x298] sm:$0xff]
    %v456 = vld [vmem:[%s9 + $0x2a0] sm:$0xff]
    %v457 = vld [vmem:[%s9 + $0x2a8] sm:$0xff]
    %v458 = vld [vmem:[%s9 + $0x2b0] sm:$0xff]
    %v459 = vld [vmem:[%s9 + $0x2b8] sm:$0xff]
    %v460 = vld [vmem:[%s9 + $0x2c0] sm:$0xff]
    %v461 = vld [vmem:[%s9 + $0x2c8] sm:$0xff]
    %v462 = vld [vmem:[%s9 + $0x2d0] sm:$0xff]
    %v463 = vld [vmem:[%s9 + $0x2d8] sm:$0xff]
    %v464 = vld [vmem:[%s9 + $0x2e0] sm:$0xff]
    %v465 = vld [vmem:[%s9 + $0x2e8] sm:$0xff]
    %v466 = vld [vmem:[%s9 + $0x2f0] sm:$0xff]
    %v467 = vld [vmem:[%s9 + $0x2f8] sm:$0xff]
    %v468 = vld [vmem:[%s9 + $0x300] sm:$0xff]
    %v469 = vld [vmem:[%s9 + $0x308] sm:$0xff]
    %v470 = vld [vmem:[%s9 + $0x310] sm:$0xff]
    %v471 = vld [vmem:[%s9 + $0x318] sm:$0xff]
    %v472 = vld [vmem:[%s9 + $0x320] sm:$0xff]
    %v473 = vld [vmem:[%s9 + $0x328] sm:$0xff]
    %v474 = vld [vmem:[%s9 + $0x330] sm:$0xff]
    %v475 = vld [vmem:[%s9 + $0x338] sm:$0xff]
    %v476 = vld [vmem:[%s9 + $0x340] sm:$0xff]
    %v477 = vld [vmem:[%s9 + $0x348] sm:$0xff]
    %v478 = vld [vmem:[%s9 + $0x350] sm:$0xff]
    %v479 = vld [vmem:[%s9 + $0x358] sm:$0xff]
    %v480 = vld [vmem:[%s9 + $0x360] sm:$0xff]
    %v481 = vld [vmem:[%s9 + $0x368] sm:$0xff]
    %v482 = vld [vmem:[%s9 + $0x370] sm:$0xff]
    %v483 = vld [vmem:[%s9 + $0x378] sm:$0xff]
    %v484 = vld [vmem:[%s9 + $0x380] sm:$0xff]
    %v485 = vld [vmem:[%s9 + $0x388] sm:$0xff]
    %v486 = vld [vmem:[%s9 + $0x390] sm:$0xff]
    %v487 = vld [vmem:[%s9 + $0x398] sm:$0xff]
    %v488 = vld [vmem:[%s9 + $0x3a0] sm:$0xff]
    %v489 = vld [vmem:[%s9 + $0x3a8] sm:$0xff]
    %v490 = vld [vmem:[%s9 + $0x3b0] sm:$0xff]
    %v491 = vld [vmem:[%s9 + $0x3b8] sm:$0xff]
    %v492 = vld [vmem:[%s9 + $0x3c0] sm:$0xff]
    %v493 = vld [vmem:[%s9 + $0x3c8] sm:$0xff]
    %v494 = vld [vmem:[%s9 + $0x3d0] sm:$0xff]
    %v495 = vld [vmem:[%s9 + $0x3d8] sm:$0xff]
    %v496 = vld [vmem:[%s9 + $0x3e0] sm:$0xff]
    %v497 = vld [vmem:[%s9 + $0x3e8] sm:$0xff]
    %v498 = vld [vmem:[%s9 + $0x3f0] sm:$0xff]
    %v499 = vld [vmem:[%s9 + $0x3f8] sm:$0xff]
    %v500 = vunpack.c.l.bf16 %v372
    %v501 = vunpack.c.h.bf16 %v372
    %v502 = vunpack.c.l.bf16 %v373
    %v503 = vunpack.c.h.bf16 %v373
    %v504 = vunpack.c.l.bf16 %v374
    %v505 = vunpack.c.h.bf16 %v374
    %v506 = vunpack.c.l.bf16 %v375
    %v507 = vunpack.c.h.bf16 %v375
    %v508 = vunpack.c.l.bf16 %v376
    %v509 = vunpack.c.h.bf16 %v376
    %v510 = vunpack.c.l.bf16 %v377
    %v511 = vunpack.c.h.bf16 %v377
    %v512 = vunpack.c.l.bf16 %v378
    %v513 = vunpack.c.h.bf16 %v378
    %v514 = vunpack.c.l.bf16 %v379
    %v515 = vunpack.c.h.bf16 %v379
    %v516 = vunpack.c.l.bf16 %v380
    %v517 = vunpack.c.h.bf16 %v380
    %v518 = vunpack.c.l.bf16 %v381
    %v519 = vunpack.c.h.bf16 %v381
    %v520 = vunpack.c.l.bf16 %v382
    %v521 = vunpack.c.h.bf16 %v382
    %v522 = vunpack.c.l.bf16 %v383
    %v523 = vunpack.c.h.bf16 %v383
    %v524 = vunpack.c.l.bf16 %v384
    %v525 = vunpack.c.h.bf16 %v384
    %v526 = vunpack.c.l.bf16 %v385
    %v527 = vunpack.c.h.bf16 %v385
    %v528 = vunpack.c.l.bf16 %v386
    %v529 = vunpack.c.h.bf16 %v386
    %v530 = vunpack.c.l.bf16 %v387
    %v531 = vunpack.c.h.bf16 %v387
    %v532 = vunpack.c.l.bf16 %v388
    %v533 = vunpack.c.h.bf16 %v388
    %v534 = vunpack.c.l.bf16 %v389
    %v535 = vunpack.c.h.bf16 %v389
    %v536 = vunpack.c.l.bf16 %v390
    %v537 = vunpack.c.h.bf16 %v390
    %v538 = vunpack.c.l.bf16 %v391
    %v539 = vunpack.c.h.bf16 %v391
    %v540 = vunpack.c.l.bf16 %v392
    %v541 = vunpack.c.h.bf16 %v392
    %v542 = vunpack.c.l.bf16 %v393
    %v543 = vunpack.c.h.bf16 %v393
    %v544 = vunpack.c.l.bf16 %v394
    %v545 = vunpack.c.h.bf16 %v394
    %v546 = vunpack.c.l.bf16 %v395
    %v547 = vunpack.c.h.bf16 %v395
    %v548 = vunpack.c.l.bf16 %v396
    %v549 = vunpack.c.h.bf16 %v396
    %v550 = vunpack.c.l.bf16 %v397
    %v551 = vunpack.c.h.bf16 %v397
    %v552 = vunpack.c.l.bf16 %v398
    %v553 = vunpack.c.h.bf16 %v398
    %v554 = vunpack.c.l.bf16 %v399
    %v555 = vunpack.c.h.bf16 %v399
    %v556 = vunpack.c.l.bf16 %v400
    %v557 = vunpack.c.h.bf16 %v400
    %v558 = vunpack.c.l.bf16 %v401
    %v559 = vunpack.c.h.bf16 %v401
    %v560 = vunpack.c.l.bf16 %v402
    %v561 = vunpack.c.h.bf16 %v402
    %v562 = vunpack.c.l.bf16 %v403
    %v563 = vunpack.c.h.bf16 %v403
    %v564 = vunpack.c.l.bf16 %v404
    %v565 = vunpack.c.h.bf16 %v404
    %v566 = vunpack.c.l.bf16 %v405
    %v567 = vunpack.c.h.bf16 %v405
    %v568 = vunpack.c.l.bf16 %v406
    %v569 = vunpack.c.h.bf16 %v406
    %v570 = vunpack.c.l.bf16 %v407
    %v571 = vunpack.c.h.bf16 %v407
    %v572 = vunpack.c.l.bf16 %v408
    %v573 = vunpack.c.h.bf16 %v408
    %v574 = vunpack.c.l.bf16 %v409
    %v575 = vunpack.c.h.bf16 %v409
    %v576 = vunpack.c.l.bf16 %v410
    %v577 = vunpack.c.h.bf16 %v410
    %v578 = vunpack.c.l.bf16 %v411
    %v579 = vunpack.c.h.bf16 %v411
    %v580 = vunpack.c.l.bf16 %v412
    %v581 = vunpack.c.h.bf16 %v412
    %v582 = vunpack.c.l.bf16 %v413
    %v583 = vunpack.c.h.bf16 %v413
    %v584 = vunpack.c.l.bf16 %v414
    %v585 = vunpack.c.h.bf16 %v414
    %v586 = vunpack.c.l.bf16 %v415
    %v587 = vunpack.c.h.bf16 %v415
    %v588 = vunpack.c.l.bf16 %v416
    %v589 = vunpack.c.h.bf16 %v416
    %v590 = vunpack.c.l.bf16 %v417
    %v591 = vunpack.c.h.bf16 %v417
    %v592 = vunpack.c.l.bf16 %v418
    %v593 = vunpack.c.h.bf16 %v418
    %v594 = vunpack.c.l.bf16 %v419
    %v595 = vunpack.c.h.bf16 %v419
    %v596 = vunpack.c.l.bf16 %v420
    %v597 = vunpack.c.h.bf16 %v420
    %v598 = vunpack.c.l.bf16 %v421
    %v599 = vunpack.c.h.bf16 %v421
    %v600 = vunpack.c.l.bf16 %v422
    %v601 = vunpack.c.h.bf16 %v422
    %v602 = vunpack.c.l.bf16 %v423
    %v603 = vunpack.c.h.bf16 %v423
    %v604 = vunpack.c.l.bf16 %v424
    %v605 = vunpack.c.h.bf16 %v424
    %v606 = vunpack.c.l.bf16 %v425
    %v607 = vunpack.c.h.bf16 %v425
    %v608 = vunpack.c.l.bf16 %v426
    %v609 = vunpack.c.h.bf16 %v426
    %v610 = vunpack.c.l.bf16 %v427
    %v611 = vunpack.c.h.bf16 %v427
    %v612 = vunpack.c.l.bf16 %v428
    %v613 = vunpack.c.h.bf16 %v428
    %v614 = vunpack.c.l.bf16 %v429
    %v615 = vunpack.c.h.bf16 %v429
    %v616 = vunpack.c.l.bf16 %v430
    %v617 = vunpack.c.h.bf16 %v430
    %v618 = vunpack.c.l.bf16 %v431
    %v619 = vunpack.c.h.bf16 %v431
    %v620 = vunpack.c.l.bf16 %v432
    %v621 = vunpack.c.h.bf16 %v432
    %v622 = vunpack.c.l.bf16 %v433
    %v623 = vunpack.c.h.bf16 %v433
    %v624 = vunpack.c.l.bf16 %v434
    %v625 = vunpack.c.h.bf16 %v434
    %v626 = vunpack.c.l.bf16 %v435
    %v627 = vunpack.c.h.bf16 %v435
    %v628 = vunpack.c.l.bf16 %v436
    %v629 = vunpack.c.h.bf16 %v436
    %v630 = vunpack.c.l.bf16 %v437
    %v631 = vunpack.c.h.bf16 %v437
    %v632 = vunpack.c.l.bf16 %v438
    %v633 = vunpack.c.h.bf16 %v438
    %v634 = vunpack.c.l.bf16 %v439
    %v635 = vunpack.c.h.bf16 %v439
    %v636 = vunpack.c.l.bf16 %v440
    %v637 = vunpack.c.h.bf16 %v440
    %v638 = vunpack.c.l.bf16 %v441
    %v639 = vunpack.c.h.bf16 %v441
    %v640 = vunpack.c.l.bf16 %v442
    %v641 = vunpack.c.h.bf16 %v442
    %v642 = vunpack.c.l.bf16 %v443
    %v643 = vunpack.c.h.bf16 %v443
    %v644 = vunpack.c.l.bf16 %v444
    %v645 = vunpack.c.h.bf16 %v444
    %v646 = vunpack.c.l.bf16 %v445
    %v647 = vunpack.c.h.bf16 %v445
    %v648 = vunpack.c.l.bf16 %v446
    %v649 = vunpack.c.h.bf16 %v446
    %v650 = vunpack.c.l.bf16 %v447
    %v651 = vunpack.c.h.bf16 %v447
    %v652 = vunpack.c.l.bf16 %v448
    %v653 = vunpack.c.h.bf16 %v448
    %v654 = vunpack.c.l.bf16 %v449
    %v655 = vunpack.c.h.bf16 %v449
    %v656 = vunpack.c.l.bf16 %v450
    %v657 = vunpack.c.h.bf16 %v450
    %v658 = vunpack.c.l.bf16 %v451
    %v659 = vunpack.c.h.bf16 %v451
    %v660 = vunpack.c.l.bf16 %v452
    %v661 = vunpack.c.h.bf16 %v452
    %v662 = vunpack.c.l.bf16 %v453
    %v663 = vunpack.c.h.bf16 %v453
    %v664 = vunpack.c.l.bf16 %v454
    %v665 = vunpack.c.h.bf16 %v454
    %v666 = vunpack.c.l.bf16 %v455
    %v667 = vunpack.c.h.bf16 %v455
    %v668 = vunpack.c.l.bf16 %v456
    %v669 = vunpack.c.h.bf16 %v456
    %v670 = vunpack.c.l.bf16 %v457
    %v671 = vunpack.c.h.bf16 %v457
    %v672 = vunpack.c.l.bf16 %v458
    %v673 = vunpack.c.h.bf16 %v458
    %v674 = vunpack.c.l.bf16 %v459
    %v675 = vunpack.c.h.bf16 %v459
    %v676 = vunpack.c.l.bf16 %v460
    %v677 = vunpack.c.h.bf16 %v460
    %v678 = vunpack.c.l.bf16 %v461
    %v679 = vunpack.c.h.bf16 %v461
    %v680 = vunpack.c.l.bf16 %v462
    %v681 = vunpack.c.h.bf16 %v462
    %v682 = vunpack.c.l.bf16 %v463
    %v683 = vunpack.c.h.bf16 %v463
    %v684 = vunpack.c.l.bf16 %v464
    %v685 = vunpack.c.h.bf16 %v464
    %v686 = vunpack.c.l.bf16 %v465
    %v687 = vunpack.c.h.bf16 %v465
    %v688 = vunpack.c.l.bf16 %v466
    %v689 = vunpack.c.h.bf16 %v466
    %v690 = vunpack.c.l.bf16 %v467
    %v691 = vunpack.c.h.bf16 %v467
    %v692 = vunpack.c.l.bf16 %v468
    %v693 = vunpack.c.h.bf16 %v468
    %v694 = vunpack.c.l.bf16 %v469
    %v695 = vunpack.c.h.bf16 %v469
    %v696 = vunpack.c.l.bf16 %v470
    %v697 = vunpack.c.h.bf16 %v470
    %v698 = vunpack.c.l.bf16 %v471
    %v699 = vunpack.c.h.bf16 %v471
    %v700 = vunpack.c.l.bf16 %v472
    %v701 = vunpack.c.h.bf16 %v472
    %v702 = vunpack.c.l.bf16 %v473
    %v703 = vunpack.c.h.bf16 %v473
    %v704 = vunpack.c.l.bf16 %v474
    %v705 = vunpack.c.h.bf16 %v474
    %v706 = vunpack.c.l.bf16 %v475
    %v707 = vunpack.c.h.bf16 %v475
    %v708 = vunpack.c.l.bf16 %v476
    %v709 = vunpack.c.h.bf16 %v476
    %v710 = vunpack.c.l.bf16 %v477
    %v711 = vunpack.c.h.bf16 %v477
    %v712 = vunpack.c.l.bf16 %v478
    %v713 = vunpack.c.h.bf16 %v478
    %v714 = vunpack.c.l.bf16 %v479
    %v715 = vunpack.c.h.bf16 %v479
    %v716 = vunpack.c.l.bf16 %v480
    %v717 = vunpack.c.h.bf16 %v480
    %v718 = vunpack.c.l.bf16 %v481
    %v719 = vunpack.c.h.bf16 %v481
    %v720 = vunpack.c.l.bf16 %v482
    %v721 = vunpack.c.h.bf16 %v482
    %v722 = vunpack.c.l.bf16 %v483
    %v723 = vunpack.c.h.bf16 %v483
    %v724 = vunpack.c.l.bf16 %v484
    %v725 = vunpack.c.h.bf16 %v484
    %v726 = vunpack.c.l.bf16 %v485
    %v727 = vunpack.c.h.bf16 %v485
    %v728 = vunpack.c.l.bf16 %v486
    %v729 = vunpack.c.h.bf16 %v486
    %v730 = vunpack.c.l.bf16 %v487
    %v731 = vunpack.c.h.bf16 %v487
    %v732 = vunpack.c.l.bf16 %v488
    %v733 = vunpack.c.h.bf16 %v488
    %v734 = vunpack.c.l.bf16 %v489
    %v735 = vunpack.c.h.bf16 %v489
    %v736 = vunpack.c.l.bf16 %v490
    %v737 = vunpack.c.h.bf16 %v490
    %v738 = vunpack.c.l.bf16 %v491
    %v739 = vunpack.c.h.bf16 %v491
    %v740 = vunpack.c.l.bf16 %v492
    %v741 = vunpack.c.h.bf16 %v492
    %v742 = vunpack.c.l.bf16 %v493
    %v743 = vunpack.c.h.bf16 %v493
    %v744 = vunpack.c.l.bf16 %v494
    %v745 = vunpack.c.h.bf16 %v494
    %v746 = vunpack.c.l.bf16 %v495
    %v747 = vunpack.c.h.bf16 %v495
    %v748 = vunpack.c.l.bf16 %v496
    %v749 = vunpack.c.h.bf16 %v496
    %v750 = vunpack.c.l.bf16 %v497
    %v751 = vunpack.c.h.bf16 %v497
    %v752 = vunpack.c.l.bf16 %v498
    %v753 = vunpack.c.h.bf16 %v498
    %v754 = vunpack.c.l.bf16 %v499
    %v755 = vunpack.c.h.bf16 %v499
    %v756 = vld [vmem:[%s10] sm:$0xff]
    %v757 = vld [vmem:[%s10 + $0x8] sm:$0xff]
    %v760 = vlaneseq
    %v761 = vshrl.u32 %v760, 7
    %v762 = vsub.s32 0, %v761
    %v763 = vrot.slane %v756, %v762
    %v764 = vlaneseq
    %v765 = vshrl.u32 %v764, 7
    %v766 = vsub.s32 1, %v765
    %v767 = vrot.slane %v756, %v766
    %v768 = vlaneseq
    %v769 = vshrl.u32 %v768, 7
    %v770 = vsub.s32 2, %v769
    %v771 = vrot.slane %v756, %v770
    %v772 = vlaneseq
    %v773 = vshrl.u32 %v772, 7
    %v774 = vsub.s32 3, %v773
    %v775 = vrot.slane %v756, %v774
    %v776 = vlaneseq
    %v777 = vshrl.u32 %v776, 7
    %v778 = vsub.s32 4, %v777
    %v779 = vrot.slane %v756, %v778
    %v780 = vlaneseq
    %v781 = vshrl.u32 %v780, 7
    %v782 = vsub.s32 5, %v781
    %v783 = vrot.slane %v756, %v782
    %v784 = vlaneseq
    %v785 = vshrl.u32 %v784, 7
    %v786 = vsub.s32 6, %v785
    %v787 = vrot.slane %v756, %v786
    %v788 = vlaneseq
    %v789 = vshrl.u32 %v788, 7
    %v790 = vsub.s32 7, %v789
    %v791 = vrot.slane %v756, %v790
    %v792 = vlaneseq
    %v793 = vshrl.u32 %v792, 7
    %v794 = vsub.s32 0, %v793
    %v795 = vrot.slane %v757, %v794
    %v796 = vlaneseq
    %v797 = vshrl.u32 %v796, 7
    %v798 = vsub.s32 1, %v797
    %v799 = vrot.slane %v757, %v798
    %v800 = vlaneseq
    %v801 = vshrl.u32 %v800, 7
    %v802 = vsub.s32 2, %v801
    %v803 = vrot.slane %v757, %v802
    %v804 = vlaneseq
    %v805 = vshrl.u32 %v804, 7
    %v806 = vsub.s32 3, %v805
    %v807 = vrot.slane %v757, %v806
    %v808 = vlaneseq
    %v809 = vshrl.u32 %v808, 7
    %v810 = vsub.s32 4, %v809
    %v811 = vrot.slane %v757, %v810
    %v812 = vlaneseq
    %v813 = vshrl.u32 %v812, 7
    %v814 = vsub.s32 5, %v813
    %v815 = vrot.slane %v757, %v814
    %v816 = vlaneseq
    %v817 = vshrl.u32 %v816, 7
    %v818 = vsub.s32 6, %v817
    %v819 = vrot.slane %v757, %v818
    %v820 = vlaneseq
    %v821 = vshrl.u32 %v820, 7
    %v822 = vsub.s32 7, %v821
    %v823 = vrot.slane %v757, %v822
    %840 = vmatprep.subr.mxu0 %v501
    %841 = vmatpush1.msra.mxu0 %v500
    %842 = vmatprep.subr.mxu0 %v517
    %843 = vmatpush1.msra.mxu0 %v516
    %844 = vmatprep.subr.mxu0 %v533
    %845 = vmatpush1.msra.mxu0 %v532
    %846 = vmatprep.subr.mxu0 %v549
    %847 = vmatpush1.msra.mxu0 %v548
    %848 = vmatprep.subr.mxu0 %v565
    %849 = vmatpush1.msra.mxu0 %v564
    %850 = vmatprep.subr.mxu0 %v581
    %851 = vmatpush1.msra.mxu0 %v580
    %852 = vmatprep.subr.mxu0 %v597
    %853 = vmatpush1.msra.mxu0 %v596
    %854 = vmatprep.subr.mxu0 %v613
    %855 = vmatpush1.msra.mxu0 %v612
    %856 = vmatprep.subr.mxu0 %v629
    %857 = vmatpush1.msra.mxu0 %v628
    %858 = vmatprep.subr.mxu0 %v645
    %859 = vmatpush1.msra.mxu0 %v644
    %860 = vmatprep.subr.mxu0 %v661
    %861 = vmatpush1.msra.mxu0 %v660
    %862 = vmatprep.subr.mxu0 %v677
    %863 = vmatpush1.msra.mxu0 %v676
    %864 = vmatprep.subr.mxu0 %v693
    %865 = vmatpush1.msra.mxu0 %v692
    %866 = vmatprep.subr.mxu0 %v709
    %867 = vmatpush1.msra.mxu0 %v708
    %868 = vmatprep.subr.mxu0 %v725
    %869 = vmatpush1.msra.mxu0 %v724
    %870 = vmatprep.subr.mxu0 %v741
    %871 = vmatpush1.msra.mxu0 %v740
    %872 = vmatprep.subr.mxu0 0.0
    %873 = vmatpush1.msra.mxu0 0.0
    %874 = vmatprep.subr.mxu0 0.0
    %875 = vmatpush1.msra.mxu0 0.0
    %876 = vmatprep.subr.mxu0 0.0
    %877 = vmatpush1.msra.mxu0 0.0
    %878 = vmatprep.subr.mxu0 0.0
    %879 = vmatpush1.msra.mxu0 0.0
    %880 = vmatprep.subr.mxu0 0.0
    %881 = vmatpush1.msra.mxu0 0.0
    %882 = vmatprep.subr.mxu0 0.0
    %883 = vmatpush1.msra.mxu0 0.0
    %884 = vmatprep.subr.mxu0 0.0
    %885 = vmatpush1.msra.mxu0 0.0
    %886 = vmatprep.subr.mxu0 0.0
    %887 = vmatpush1.msra.mxu0 0.0
    %888 = vmatprep.subr.mxu0 0.0
    %889 = vmatpush1.msra.mxu0 0.0
    %890 = vmatprep.subr.mxu0 0.0
    %891 = vmatpush1.msra.mxu0 0.0
    %892 = vmatprep.subr.mxu0 0.0
    %893 = vmatpush1.msra.mxu0 0.0
    %894 = vmatprep.subr.mxu0 0.0
    %895 = vmatpush1.msra.mxu0 0.0
    %896 = vmatprep.subr.mxu0 0.0
    %897 = vmatpush1.msra.mxu0 0.0
    %898 = vmatprep.subr.mxu0 0.0
    %899 = vmatpush1.msra.mxu0 0.0
    %900 = vmatprep.subr.mxu0 0.0
    %901 = vmatpush1.msra.mxu0 0.0
    %902 = vmatprep.subr.mxu0 0.0
    %903 = vmatpush1.msra.mxu0 0.0
    %904 = vmatprep.mubr.f32.mxu0 0.0
    %905 = vmatmul.mubr.f32.gmra.mrb[0].mxu0 %v371
    %v906 = vpop.f32.mrb[0].mxu0
    %v907 = vadd.f32 %v763, %v906
    %v908 = vpop.f32.mrb[0].mxu0
    %v909 = vadd.f32 %v767, %v908
    %910 = vdwg.mxu0
    %911 = vmatprep.subr.mxu0 %v503
    %912 = vmatpush1.msra.mxu0 %v502
    %913 = vmatprep.subr.mxu0 %v519
    %914 = vmatpush1.msra.mxu0 %v518
    %915 = vmatprep.subr.mxu0 %v535
    %916 = vmatpush1.msra.mxu0 %v534
    %917 = vmatprep.subr.mxu0 %v551
    %918 = vmatpush1.msra.mxu0 %v550
    %919 = vmatprep.subr.mxu0 %v567
    %920 = vmatpush1.msra.mxu0 %v566
    %921 = vmatprep.subr.mxu0 %v583
    %922 = vmatpush1.msra.mxu0 %v582
    %923 = vmatprep.subr.mxu0 %v599
    %924 = vmatpush1.msra.mxu0 %v598
    %925 = vmatprep.subr.mxu0 %v615
    %926 = vmatpush1.msra.mxu0 %v614
    %927 = vmatprep.subr.mxu0 %v631
    %928 = vmatpush1.msra.mxu0 %v630
    %929 = vmatprep.subr.mxu0 %v647
    %930 = vmatpush1.msra.mxu0 %v646
    %931 = vmatprep.subr.mxu0 %v663
    %932 = vmatpush1.msra.mxu0 %v662
    %933 = vmatprep.subr.mxu0 %v679
    %934 = vmatpush1.msra.mxu0 %v678
    %935 = vmatprep.subr.mxu0 %v695
    %936 = vmatpush1.msra.mxu0 %v694
    %937 = vmatprep.subr.mxu0 %v711
    %938 = vmatpush1.msra.mxu0 %v710
    %939 = vmatprep.subr.mxu0 %v727
    %940 = vmatpush1.msra.mxu0 %v726
    %941 = vmatprep.subr.mxu0 %v743
    %942 = vmatpush1.msra.mxu0 %v742
    %943 = vmatprep.subr.mxu0 0.0
    %944 = vmatpush1.msra.mxu0 0.0
    %945 = vmatprep.subr.mxu0 0.0
    %946 = vmatpush1.msra.mxu0 0.0
    %947 = vmatprep.subr.mxu0 0.0
    %948 = vmatpush1.msra.mxu0 0.0
    %949 = vmatprep.subr.mxu0 0.0
    %950 = vmatpush1.msra.mxu0 0.0
    %951 = vmatprep.subr.mxu0 0.0
    %952 = vmatpush1.msra.mxu0 0.0
    %953 = vmatprep.subr.mxu0 0.0
    %954 = vmatpush1.msra.mxu0 0.0
    %955 = vmatprep.subr.mxu0 0.0
    %956 = vmatpush1.msra.mxu0 0.0
    %957 = vmatprep.subr.mxu0 0.0
    %958 = vmatpush1.msra.mxu0 0.0
    %959 = vmatprep.subr.mxu0 0.0
    %960 = vmatpush1.msra.mxu0 0.0
    %961 = vmatprep.subr.mxu0 0.0
    %962 = vmatpush1.msra.mxu0 0.0
    %963 = vmatprep.subr.mxu0 0.0
    %964 = vmatpush1.msra.mxu0 0.0
    %965 = vmatprep.subr.mxu0 0.0
    %966 = vmatpush1.msra.mxu0 0.0
    %967 = vmatprep.subr.mxu0 0.0
    %968 = vmatpush1.msra.mxu0 0.0
    %969 = vmatprep.subr.mxu0 0.0
    %970 = vmatpush1.msra.mxu0 0.0
    %971 = vmatprep.subr.mxu0 0.0
    %972 = vmatpush1.msra.mxu0 0.0
    %973 = vmatprep.subr.mxu0 0.0
    %974 = vmatpush1.msra.mxu0 0.0
    %975 = vmatprep.mubr.f32.mxu0 0.0
    %976 = vmatmul.mubr.f32.gmra.mrb[0].mxu0 %v371
    %v977 = vpop.f32.mrb[0].mxu0
    %v978 = vadd.f32 %v771, %v977
    %v979 = vpop.f32.mrb[0].mxu0
    %v980 = vadd.f32 %v775, %v979
    %981 = vdwg.mxu0
    %982 = vmatprep.subr.mxu0 %v505
    %983 = vmatpush1.msra.mxu0 %v504
    %984 = vmatprep.subr.mxu0 %v521
    %985 = vmatpush1.msra.mxu0 %v520
    %986 = vmatprep.subr.mxu0 %v537
    %987 = vmatpush1.msra.mxu0 %v536
    %988 = vmatprep.subr.mxu0 %v553
    %989 = vmatpush1.msra.mxu0 %v552
    %990 = vmatprep.subr.mxu0 %v569
    %991 = vmatpush1.msra.mxu0 %v568
    %992 = vmatprep.subr.mxu0 %v585
    %993 = vmatpush1.msra.mxu0 %v584
    %994 = vmatprep.subr.mxu0 %v601
    %995 = vmatpush1.msra.mxu0 %v600
    %996 = vmatprep.subr.mxu0 %v617
    %997 = vmatpush1.msra.mxu0 %v616
    %998 = vmatprep.subr.mxu0 %v633
    %999 = vmatpush1.msra.mxu0 %v632
    %1000 = vmatprep.subr.mxu0 %v649
    %1001 = vmatpush1.msra.mxu0 %v648
    %1002 = vmatprep.subr.mxu0 %v665
    %1003 = vmatpush1.msra.mxu0 %v664
    %1004 = vmatprep.subr.mxu0 %v681
    %1005 = vmatpush1.msra.mxu0 %v680
    %1006 = vmatprep.subr.mxu0 %v697
    %1007 = vmatpush1.msra.mxu0 %v696
    %1008 = vmatprep.subr.mxu0 %v713
    %1009 = vmatpush1.msra.mxu0 %v712
    %1010 = vmatprep.subr.mxu0 %v729
    %1011 = vmatpush1.msra.mxu0 %v728
    %1012 = vmatprep.subr.mxu0 %v745
    %1013 = vmatpush1.msra.mxu0 %v744
    %1014 = vmatprep.subr.mxu0 0.0
    %1015 = vmatpush1.msra.mxu0 0.0
    %1016 = vmatprep.subr.mxu0 0.0
    %1017 = vmatpush1.msra.mxu0 0.0
    %1018 = vmatprep.subr.mxu0 0.0
    %1019 = vmatpush1.msra.mxu0 0.0
    %1020 = vmatprep.subr.mxu0 0.0
    %1021 = vmatpush1.msra.mxu0 0.0
    %1022 = vmatprep.subr.mxu0 0.0
    %1023 = vmatpush1.msra.mxu0 0.0
    %1024 = vmatprep.subr.mxu0 0.0
    %1025 = vmatpush1.msra.mxu0 0.0
    %1026 = vmatprep.subr.mxu0 0.0
    %1027 = vmatpush1.msra.mxu0 0.0
    %1028 = vmatprep.subr.mxu0 0.0
    %1029 = vmatpush1.msra.mxu0 0.0
    %1030 = vmatprep.subr.mxu0 0.0
    %1031 = vmatpush1.msra.mxu0 0.0
    %1032 = vmatprep.subr.mxu0 0.0
    %1033 = vmatpush1.msra.mxu0 0.0
    %1034 = vmatprep.subr.mxu0 0.0
    %1035 = vmatpush1.msra.mxu0 0.0
    %1036 = vmatprep.subr.mxu0 0.0
    %1037 = vmatpush1.msra.mxu0 0.0
    %1038 = vmatprep.subr.mxu0 0.0
    %1039 = vmatpush1.msra.mxu0 0.0
    %1040 = vmatprep.subr.mxu0 0.0
    %1041 = vmatpush1.msra.mxu0 0.0
    %1042 = vmatprep.subr.mxu0 0.0
    %1043 = vmatpush1.msra.mxu0 0.0
    %1044 = vmatprep.subr.mxu0 0.0
    %1045 = vmatpush1.msra.mxu0 0.0
    %1046 = vmatprep.mubr.f32.mxu0 0.0
    %1047 = vmatmul.mubr.f32.gmra.mrb[0].mxu0 %v371
    %v1048 = vpop.f32.mrb[0].mxu0
    %v1049 = vadd.f32 %v779, %v1048
    %v1050 = vpop.f32.mrb[0].mxu0
    %v1051 = vadd.f32 %v783, %v1050
    %1052 = vdwg.mxu0
    %1053 = vmatprep.subr.mxu0 %v507
    %1054 = vmatpush1.msra.mxu0 %v506
    %1055 = vmatprep.subr.mxu0 %v523
    %1056 = vmatpush1.msra.mxu0 %v522
    %1057 = vmatprep.subr.mxu0 %v539
    %1058 = vmatpush1.msra.mxu0 %v538
    %1059 = vmatprep.subr.mxu0 %v555
    %1060 = vmatpush1.msra.mxu0 %v554
    %1061 = vmatprep.subr.mxu0 %v571
    %1062 = vmatpush1.msra.mxu0 %v570
    %1063 = vmatprep.subr.mxu0 %v587
    %1064 = vmatpush1.msra.mxu0 %v586
    %1065 = vmatprep.subr.mxu0 %v603
    %1066 = vmatpush1.msra.mxu0 %v602
    %1067 = vmatprep.subr.mxu0 %v619
    %1068 = vmatpush1.msra.mxu0 %v618
    %1069 = vmatprep.subr.mxu0 %v635
    %1070 = vmatpush1.msra.mxu0 %v634
    %1071 = vmatprep.subr.mxu0 %v651
    %1072 = vmatpush1.msra.mxu0 %v650
    %1073 = vmatprep.subr.mxu0 %v667
    %1074 = vmatpush1.msra.mxu0 %v666
    %1075 = vmatprep.subr.mxu0 %v683
    %1076 = vmatpush1.msra.mxu0 %v682
    %1077 = vmatprep.subr.mxu0 %v699
    %1078 = vmatpush1.msra.mxu0 %v698
    %1079 = vmatprep.subr.mxu0 %v715
    %1080 = vmatpush1.msra.mxu0 %v714
    %1081 = vmatprep.subr.mxu0 %v731
    %1082 = vmatpush1.msra.mxu0 %v730
    %1083 = vmatprep.subr.mxu0 %v747
    %1084 = vmatpush1.msra.mxu0 %v746
    %1085 = vmatprep.subr.mxu0 0.0
    %1086 = vmatpush1.msra.mxu0 0.0
    %1087 = vmatprep.subr.mxu0 0.0
    %1088 = vmatpush1.msra.mxu0 0.0
    %1089 = vmatprep.subr.mxu0 0.0
    %1090 = vmatpush1.msra.mxu0 0.0
    %1091 = vmatprep.subr.mxu0 0.0
    %1092 = vmatpush1.msra.mxu0 0.0
    %1093 = vmatprep.subr.mxu0 0.0
    %1094 = vmatpush1.msra.mxu0 0.0
    %1095 = vmatprep.subr.mxu0 0.0
    %1096 = vmatpush1.msra.mxu0 0.0
    %1097 = vmatprep.subr.mxu0 0.0
    %1098 = vmatpush1.msra.mxu0 0.0
    %1099 = vmatprep.subr.mxu0 0.0
    %1100 = vmatpush1.msra.mxu0 0.0
    %1101 = vmatprep.subr.mxu0 0.0
    %1102 = vmatpush1.msra.mxu0 0.0
    %1103 = vmatprep.subr.mxu0 0.0
    %1104 = vmatpush1.msra.mxu0 0.0
    %1105 = vmatprep.subr.mxu0 0.0
    %1106 = vmatpush1.msra.mxu0 0.0
    %1107 = vmatprep.subr.mxu0 0.0
    %1108 = vmatpush1.msra.mxu0 0.0
    %1109 = vmatprep.subr.mxu0 0.0
    %1110 = vmatpush1.msra.mxu0 0.0
    %1111 = vmatprep.subr.mxu0 0.0
    %1112 = vmatpush1.msra.mxu0 0.0
    %1113 = vmatprep.subr.mxu0 0.0
    %1114 = vmatpush1.msra.mxu0 0.0
    %1115 = vmatprep.subr.mxu0 0.0
    %1116 = vmatpush1.msra.mxu0 0.0
    %1117 = vmatprep.mubr.f32.mxu0 0.0
    %1118 = vmatmul.mubr.f32.gmra.mrb[0].mxu0 %v371
    %v1119 = vpop.f32.mrb[0].mxu0
    %v1120 = vadd.f32 %v787, %v1119
    %v1121 = vpop.f32.mrb[0].mxu0
    %v1122 = vadd.f32 %v791, %v1121
    %1123 = vdwg.mxu0
    %1124 = vmatprep.subr.mxu0 %v509
    %1125 = vmatpush1.msra.mxu0 %v508
    %1126 = vmatprep.subr.mxu0 %v525
    %1127 = vmatpush1.msra.mxu0 %v524
    %1128 = vmatprep.subr.mxu0 %v541
    %1129 = vmatpush1.msra.mxu0 %v540
    %1130 = vmatprep.subr.mxu0 %v557
    %1131 = vmatpush1.msra.mxu0 %v556
    %1132 = vmatprep.subr.mxu0 %v573
    %1133 = vmatpush1.msra.mxu0 %v572
    %1134 = vmatprep.subr.mxu0 %v589
    %1135 = vmatpush1.msra.mxu0 %v588
    %1136 = vmatprep.subr.mxu0 %v605
    %1137 = vmatpush1.msra.mxu0 %v604
    %1138 = vmatprep.subr.mxu0 %v621
    %1139 = vmatpush1.msra.mxu0 %v620
    %1140 = vmatprep.subr.mxu0 %v637
    %1141 = vmatpush1.msra.mxu0 %v636
    %1142 = vmatprep.subr.mxu0 %v653
    %1143 = vmatpush1.msra.mxu0 %v652
    %1144 = vmatprep.subr.mxu0 %v669
    %1145 = vmatpush1.msra.mxu0 %v668
    %1146 = vmatprep.subr.mxu0 %v685
    %1147 = vmatpush1.msra.mxu0 %v684
    %1148 = vmatprep.subr.mxu0 %v701
    %1149 = vmatpush1.msra.mxu0 %v700
    %1150 = vmatprep.subr.mxu0 %v717
    %1151 = vmatpush1.msra.mxu0 %v716
    %1152 = vmatprep.subr.mxu0 %v733
    %1153 = vmatpush1.msra.mxu0 %v732
    %1154 = vmatprep.subr.mxu0 %v749
    %1155 = vmatpush1.msra.mxu0 %v748
    %1156 = vmatprep.subr.mxu0 0.0
    %1157 = vmatpush1.msra.mxu0 0.0
    %1158 = vmatprep.subr.mxu0 0.0
    %1159 = vmatpush1.msra.mxu0 0.0
    %1160 = vmatprep.subr.mxu0 0.0
    %1161 = vmatpush1.msra.mxu0 0.0
    %1162 = vmatprep.subr.mxu0 0.0
    %1163 = vmatpush1.msra.mxu0 0.0
    %1164 = vmatprep.subr.mxu0 0.0
    %1165 = vmatpush1.msra.mxu0 0.0
    %1166 = vmatprep.subr.mxu0 0.0
    %1167 = vmatpush1.msra.mxu0 0.0
    %1168 = vmatprep.subr.mxu0 0.0
    %1169 = vmatpush1.msra.mxu0 0.0
    %1170 = vmatprep.subr.mxu0 0.0
    %1171 = vmatpush1.msra.mxu0 0.0
    %1172 = vmatprep.subr.mxu0 0.0
    %1173 = vmatpush1.msra.mxu0 0.0
    %1174 = vmatprep.subr.mxu0 0.0
    %1175 = vmatpush1.msra.mxu0 0.0
    %1176 = vmatprep.subr.mxu0 0.0
    %1177 = vmatpush1.msra.mxu0 0.0
    %1178 = vmatprep.subr.mxu0 0.0
    %1179 = vmatpush1.msra.mxu0 0.0
    %1180 = vmatprep.subr.mxu0 0.0
    %1181 = vmatpush1.msra.mxu0 0.0
    %1182 = vmatprep.subr.mxu0 0.0
    %1183 = vmatpush1.msra.mxu0 0.0
    %1184 = vmatprep.subr.mxu0 0.0
    %1185 = vmatpush1.msra.mxu0 0.0
    %1186 = vmatprep.subr.mxu0 0.0
    %1187 = vmatpush1.msra.mxu0 0.0
    %1188 = vmatprep.mubr.f32.mxu0 0.0
    %1189 = vmatmul.mubr.f32.gmra.mrb[0].mxu0 %v371
    %v1190 = vpop.f32.mrb[0].mxu0
    %v1191 = vadd.f32 %v795, %v1190
    %v1192 = vpop.f32.mrb[0].mxu0
    %v1193 = vadd.f32 %v799, %v1192
    %1194 = vdwg.mxu0
    %1195 = vmatprep.subr.mxu0 %v511
    %1196 = vmatpush1.msra.mxu0 %v510
    %1197 = vmatprep.subr.mxu0 %v527
    %1198 = vmatpush1.msra.mxu0 %v526
    %1199 = vmatprep.subr.mxu0 %v543
    %1200 = vmatpush1.msra.mxu0 %v542
    %1201 = vmatprep.subr.mxu0 %v559
    %1202 = vmatpush1.msra.mxu0 %v558
    %1203 = vmatprep.subr.mxu0 %v575
    %1204 = vmatpush1.msra.mxu0 %v574
    %1205 = vmatprep.subr.mxu0 %v591
    %1206 = vmatpush1.msra.mxu0 %v590
    %1207 = vmatprep.subr.mxu0 %v607
    %1208 = vmatpush1.msra.mxu0 %v606
    %1209 = vmatprep.subr.mxu0 %v623
    %1210 = vmatpush1.msra.mxu0 %v622
    %1211 = vmatprep.subr.mxu0 %v639
    %1212 = vmatpush1.msra.mxu0 %v638
    %1213 = vmatprep.subr.mxu0 %v655
    %1214 = vmatpush1.msra.mxu0 %v654
    %1215 = vmatprep.subr.mxu0 %v671
    %1216 = vmatpush1.msra.mxu0 %v670
    %1217 = vmatprep.subr.mxu0 %v687
    %1218 = vmatpush1.msra.mxu0 %v686
    %1219 = vmatprep.subr.mxu0 %v703
    %1220 = vmatpush1.msra.mxu0 %v702
    %1221 = vmatprep.subr.mxu0 %v719
    %1222 = vmatpush1.msra.mxu0 %v718
    %1223 = vmatprep.subr.mxu0 %v735
    %1224 = vmatpush1.msra.mxu0 %v734
    %1225 = vmatprep.subr.mxu0 %v751
    %1226 = vmatpush1.msra.mxu0 %v750
    %1227 = vmatprep.subr.mxu0 0.0
    %1228 = vmatpush1.msra.mxu0 0.0
    %1229 = vmatprep.subr.mxu0 0.0
    %1230 = vmatpush1.msra.mxu0 0.0
    %1231 = vmatprep.subr.mxu0 0.0
    %1232 = vmatpush1.msra.mxu0 0.0
    %1233 = vmatprep.subr.mxu0 0.0
    %1234 = vmatpush1.msra.mxu0 0.0
    %1235 = vmatprep.subr.mxu0 0.0
    %1236 = vmatpush1.msra.mxu0 0.0
    %1237 = vmatprep.subr.mxu0 0.0
    %1238 = vmatpush1.msra.mxu0 0.0
    %1239 = vmatprep.subr.mxu0 0.0
    %1240 = vmatpush1.msra.mxu0 0.0
    %1241 = vmatprep.subr.mxu0 0.0
    %1242 = vmatpush1.msra.mxu0 0.0
    %1243 = vmatprep.subr.mxu0 0.0
    %1244 = vmatpush1.msra.mxu0 0.0
    %1245 = vmatprep.subr.mxu0 0.0
    %1246 = vmatpush1.msra.mxu0 0.0
    %1247 = vmatprep.subr.mxu0 0.0
    %1248 = vmatpush1.msra.mxu0 0.0
    %1249 = vmatprep.subr.mxu0 0.0
    %1250 = vmatpush1.msra.mxu0 0.0
    %1251 = vmatprep.subr.mxu0 0.0
    %1252 = vmatpush1.msra.mxu0 0.0
    %1253 = vmatprep.subr.mxu0 0.0
    %1254 = vmatpush1.msra.mxu0 0.0
    %1255 = vmatprep.subr.mxu0 0.0
    %1256 = vmatpush1.msra.mxu0 0.0
    %1257 = vmatprep.subr.mxu0 0.0
    %1258 = vmatpush1.msra.mxu0 0.0
    %1259 = vmatprep.mubr.f32.mxu0 0.0
    %1260 = vmatmul.mubr.f32.gmra.mrb[0].mxu0 %v371
    %v1261 = vpop.f32.mrb[0].mxu0
    %v1262 = vadd.f32 %v803, %v1261
    %v1263 = vpop.f32.mrb[0].mxu0
    %v1264 = vadd.f32 %v807, %v1263
    %1265 = vdwg.mxu0
    %1266 = vmatprep.subr.mxu0 %v513
    %1267 = vmatpush1.msra.mxu0 %v512
    %1268 = vmatprep.subr.mxu0 %v529
    %1269 = vmatpush1.msra.mxu0 %v528
    %1270 = vmatprep.subr.mxu0 %v545
    %1271 = vmatpush1.msra.mxu0 %v544
    %1272 = vmatprep.subr.mxu0 %v561
    %1273 = vmatpush1.msra.mxu0 %v560
    %1274 = vmatprep.subr.mxu0 %v577
    %1275 = vmatpush1.msra.mxu0 %v576
    %1276 = vmatprep.subr.mxu0 %v593
    %1277 = vmatpush1.msra.mxu0 %v592
    %1278 = vmatprep.subr.mxu0 %v609
    %1279 = vmatpush1.msra.mxu0 %v608
    %1280 = vmatprep.subr.mxu0 %v625
    %1281 = vmatpush1.msra.mxu0 %v624
    %1282 = vmatprep.subr.mxu0 %v641
    %1283 = vmatpush1.msra.mxu0 %v640
    %1284 = vmatprep.subr.mxu0 %v657
    %1285 = vmatpush1.msra.mxu0 %v656
    %1286 = vmatprep.subr.mxu0 %v673
    %1287 = vmatpush1.msra.mxu0 %v672
    %1288 = vmatprep.subr.mxu0 %v689
    %1289 = vmatpush1.msra.mxu0 %v688
    %1290 = vmatprep.subr.mxu0 %v705
    %1291 = vmatpush1.msra.mxu0 %v704
    %1292 = vmatprep.subr.mxu0 %v721
    %1293 = vmatpush1.msra.mxu0 %v720
    %1294 = vmatprep.subr.mxu0 %v737
    %1295 = vmatpush1.msra.mxu0 %v736
    %1296 = vmatprep.subr.mxu0 %v753
    %1297 = vmatpush1.msra.mxu0 %v752
    %1298 = vmatprep.subr.mxu0 0.0
    %1299 = vmatpush1.msra.mxu0 0.0
    %1300 = vmatprep.subr.mxu0 0.0
    %1301 = vmatpush1.msra.mxu0 0.0
    %1302 = vmatprep.subr.mxu0 0.0
    %1303 = vmatpush1.msra.mxu0 0.0
    %1304 = vmatprep.subr.mxu0 0.0
    %1305 = vmatpush1.msra.mxu0 0.0
    %1306 = vmatprep.subr.mxu0 0.0
    %1307 = vmatpush1.msra.mxu0 0.0
    %1308 = vmatprep.subr.mxu0 0.0
    %1309 = vmatpush1.msra.mxu0 0.0
    %1310 = vmatprep.subr.mxu0 0.0
    %1311 = vmatpush1.msra.mxu0 0.0
    %1312 = vmatprep.subr.mxu0 0.0
    %1313 = vmatpush1.msra.mxu0 0.0
    %1314 = vmatprep.subr.mxu0 0.0
    %1315 = vmatpush1.msra.mxu0 0.0
    %1316 = vmatprep.subr.mxu0 0.0
    %1317 = vmatpush1.msra.mxu0 0.0
    %1318 = vmatprep.subr.mxu0 0.0
    %1319 = vmatpush1.msra.mxu0 0.0
    %1320 = vmatprep.subr.mxu0 0.0
    %1321 = vmatpush1.msra.mxu0 0.0
    %1322 = vmatprep.subr.mxu0 0.0
    %1323 = vmatpush1.msra.mxu0 0.0
    %1324 = vmatprep.subr.mxu0 0.0
    %1325 = vmatpush1.msra.mxu0 0.0
    %1326 = vmatprep.subr.mxu0 0.0
    %1327 = vmatpush1.msra.mxu0 0.0
    %1328 = vmatprep.subr.mxu0 0.0
    %1329 = vmatpush1.msra.mxu0 0.0
    %1330 = vmatprep.mubr.f32.mxu0 0.0
    %1331 = vmatmul.mubr.f32.gmra.mrb[0].mxu0 %v371
    %v1332 = vpop.f32.mrb[0].mxu0
    %v1333 = vadd.f32 %v811, %v1332
    %v1334 = vpop.f32.mrb[0].mxu0
    %v1335 = vadd.f32 %v815, %v1334
    %1336 = vdwg.mxu0
    %1337 = vmatprep.subr.mxu0 %v515
    %1338 = vmatpush1.msra.mxu0 %v514
    %1339 = vmatprep.subr.mxu0 %v531
    %1340 = vmatpush1.msra.mxu0 %v530
    %1341 = vmatprep.subr.mxu0 %v547
    %1342 = vmatpush1.msra.mxu0 %v546
    %1343 = vmatprep.subr.mxu0 %v563
    %1344 = vmatpush1.msra.mxu0 %v562
    %1345 = vmatprep.subr.mxu0 %v579
    %1346 = vmatpush1.msra.mxu0 %v578
    %1347 = vmatprep.subr.mxu0 %v595
    %1348 = vmatpush1.msra.mxu0 %v594
    %1349 = vmatprep.subr.mxu0 %v611
    %1350 = vmatpush1.msra.mxu0 %v610
    %1351 = vmatprep.subr.mxu0 %v627
    %1352 = vmatpush1.msra.mxu0 %v626
    %1353 = vmatprep.subr.mxu0 %v643
    %1354 = vmatpush1.msra.mxu0 %v642
    %1355 = vmatprep.subr.mxu0 %v659
    %1356 = vmatpush1.msra.mxu0 %v658
    %1357 = vmatprep.subr.mxu0 %v675
    %1358 = vmatpush1.msra.mxu0 %v674
    %1359 = vmatprep.subr.mxu0 %v691
    %1360 = vmatpush1.msra.mxu0 %v690
    %1361 = vmatprep.subr.mxu0 %v707
    %1362 = vmatpush1.msra.mxu0 %v706
    %1363 = vmatprep.subr.mxu0 %v723
    %1364 = vmatpush1.msra.mxu0 %v722
    %1365 = vmatprep.subr.mxu0 %v739
    %1366 = vmatpush1.msra.mxu0 %v738
    %1367 = vmatprep.subr.mxu0 %v755
    %1368 = vmatpush1.msra.mxu0 %v754
    %1369 = vmatprep.subr.mxu0 0.0
    %1370 = vmatpush1.msra.mxu0 0.0
    %1371 = vmatprep.subr.mxu0 0.0
    %1372 = vmatpush1.msra.mxu0 0.0
    %1373 = vmatprep.subr.mxu0 0.0
    %1374 = vmatpush1.msra.mxu0 0.0
    %1375 = vmatprep.subr.mxu0 0.0
    %1376 = vmatpush1.msra.mxu0 0.0
    %1377 = vmatprep.subr.mxu0 0.0
    %1378 = vmatpush1.msra.mxu0 0.0
    %1379 = vmatprep.subr.mxu0 0.0
    %1380 = vmatpush1.msra.mxu0 0.0
    %1381 = vmatprep.subr.mxu0 0.0
    %1382 = vmatpush1.msra.mxu0 0.0
    %1383 = vmatprep.subr.mxu0 0.0
    %1384 = vmatpush1.msra.mxu0 0.0
    %1385 = vmatprep.subr.mxu0 0.0
    %1386 = vmatpush1.msra.mxu0 0.0
    %1387 = vmatprep.subr.mxu0 0.0
    %1388 = vmatpush1.msra.mxu0 0.0
    %1389 = vmatprep.subr.mxu0 0.0
    %1390 = vmatpush1.msra.mxu0 0.0
    %1391 = vmatprep.subr.mxu0 0.0
    %1392 = vmatpush1.msra.mxu0 0.0
    %1393 = vmatprep.subr.mxu0 0.0
    %1394 = vmatpush1.msra.mxu0 0.0
    %1395 = vmatprep.subr.mxu0 0.0
    %1396 = vmatpush1.msra.mxu0 0.0
    %1397 = vmatprep.subr.mxu0 0.0
    %1398 = vmatpush1.msra.mxu0 0.0
    %1399 = vmatprep.subr.mxu0 0.0
    %1400 = vmatpush1.msra.mxu0 0.0
    %1401 = vmatprep.mubr.f32.mxu0 0.0
    %1402 = vmatmul.mubr.f32.gmra.mrb[0].mxu0 %v371
    %v1403 = vpop.f32.mrb[0].mxu0
    %v1404 = vadd.f32 %v819, %v1403
    %v1405 = vpop.f32.mrb[0].mxu0
    %v1406 = vadd.f32 %v823, %v1405
    %1407 = vdwg.mxu0
    %v1408 = vmax.f32 %v907, 0.0
    %v1409 = vmax.f32 %v909, 0.0
    %v1410 = vmax.f32 %v978, 0.0
    %v1411 = vmax.f32 %v980, 0.0
    %v1412 = vmax.f32 %v1049, 0.0
    %v1413 = vmax.f32 %v1051, 0.0
    %v1414 = vmax.f32 %v1120, 0.0
    %v1415 = vmax.f32 %v1122, 0.0
    %v1416 = vmax.f32 %v1191, 0.0
    %v1417 = vmax.f32 %v1193, 0.0
    %v1418 = vmax.f32 %v1262, 0.0
    %v1419 = vmax.f32 %v1264, 0.0
    %v1420 = vmax.f32 %v1333, 0.0
    %v1421 = vmax.f32 %v1335, 0.0
    %v1422 = vmax.f32 %v1404, 0.0
    %v1423 = vmax.f32 %v1406, 0.0
    %v1424 = vld [vmem:[#allocation2] sm:$0xf]
    %v1425 = vld [vmem:[#allocation2 + $0x4] sm:$0xf]
    %v1426 = vld [vmem:[#allocation2 + $0x8] sm:$0xf]
    %v1427 = vld [vmem:[#allocation2 + $0xc] sm:$0xf]
    %v1428 = vld [vmem:[#allocation2 + $0x10] sm:$0xf]
    %v1429 = vld [vmem:[#allocation2 + $0x14] sm:$0xf]
    %v1430 = vld [vmem:[#allocation2 + $0x18] sm:$0xf]
    %v1431 = vld [vmem:[#allocation2 + $0x1c] sm:$0xf]
    %v1432 = vld [vmem:[#allocation2 + $0x20] sm:$0xf]
    %v1433 = vld [vmem:[#allocation2 + $0x24] sm:$0xf]
    %v1434 = vld [vmem:[#allocation2 + $0x28] sm:$0xf]
    %v1435 = vld [vmem:[#allocation2 + $0x2c] sm:$0xf]
    %v1436 = vld [vmem:[#allocation2 + $0x30] sm:$0xf]
    %v1437 = vld [vmem:[#allocation2 + $0x34] sm:$0xf]
    %v1438 = vld [vmem:[#allocation2 + $0x38] sm:$0xf]
    %v1439 = vld [vmem:[#allocation2 + $0x3c] sm:$0xf]
    %v1440 = vld [vmem:[#allocation2 + $0x40] sm:$0xf]
    %v1441 = vld [vmem:[#allocation2 + $0x44] sm:$0xf]
    %v1442 = vld [vmem:[#allocation2 + $0x48] sm:$0xf]
    %v1443 = vld [vmem:[#allocation2 + $0x4c] sm:$0xf]
    %v1444 = vld [vmem:[#allocation2 + $0x50] sm:$0xf]
    %v1445 = vld [vmem:[#allocation2 + $0x54] sm:$0xf]
    %v1446 = vld [vmem:[#allocation2 + $0x58] sm:$0xf]
    %v1447 = vld [vmem:[#allocation2 + $0x5c] sm:$0xf]
    %v1448 = vld [vmem:[#allocation2 + $0x60] sm:$0xf]
    %v1449 = vld [vmem:[#allocation2 + $0x64] sm:$0xf]
    %v1450 = vld [vmem:[#allocation2 + $0x68] sm:$0xf]
    %v1451 = vld [vmem:[#allocation2 + $0x6c] sm:$0xf]
    %v1452 = vld [vmem:[#allocation2 + $0x70] sm:$0xf]
    %v1453 = vld [vmem:[#allocation2 + $0x74] sm:$0xf]
    %v1454 = vld [vmem:[#allocation2 + $0x78] sm:$0xf]
    %v1455 = vld [vmem:[#allocation2 + $0x7c] sm:$0xf]
    %v1456 = vld [vmem:[#allocation2 + $0x80] sm:$0xf]
    %v1457 = vld [vmem:[#allocation2 + $0x84] sm:$0xf]
    %v1458 = vld [vmem:[#allocation2 + $0x88] sm:$0xf]
    %v1459 = vld [vmem:[#allocation2 + $0x8c] sm:$0xf]
    %v1460 = vld [vmem:[#allocation2 + $0x90] sm:$0xf]
    %v1461 = vld [vmem:[#allocation2 + $0x94] sm:$0xf]
    %v1462 = vld [vmem:[#allocation2 + $0x98] sm:$0xf]
    %v1463 = vld [vmem:[#allocation2 + $0x9c] sm:$0xf]
    %v1464 = vld [vmem:[#allocation2 + $0xa0] sm:$0xf]
    %v1465 = vld [vmem:[#allocation2 + $0xa4] sm:$0xf]
    %v1466 = vld [vmem:[#allocation2 + $0xa8] sm:$0xf]
    %v1467 = vld [vmem:[#allocation2 + $0xac] sm:$0xf]
    %v1468 = vld [vmem:[#allocation2 + $0xb0] sm:$0xf]
    %v1469 = vld [vmem:[#allocation2 + $0xb4] sm:$0xf]
    %v1470 = vld [vmem:[#allocation2 + $0xb8] sm:$0xf]
    %v1471 = vld [vmem:[#allocation2 + $0xbc] sm:$0xf]
    %v1472 = vld [vmem:[#allocation2 + $0xc0] sm:$0xf]
    %v1473 = vld [vmem:[#allocation2 + $0xc4] sm:$0xf]
    %v1474 = vld [vmem:[#allocation2 + $0xc8] sm:$0xf]
    %v1475 = vld [vmem:[#allocation2 + $0xcc] sm:$0xf]
    %v1476 = vld [vmem:[#allocation2 + $0xd0] sm:$0xf]
    %v1477 = vld [vmem:[#allocation2 + $0xd4] sm:$0xf]
    %v1478 = vld [vmem:[#allocation2 + $0xd8] sm:$0xf]
    %v1479 = vld [vmem:[#allocation2 + $0xdc] sm:$0xf]
    %v1480 = vld [vmem:[#allocation2 + $0xe0] sm:$0xf]
    %v1481 = vld [vmem:[#allocation2 + $0xe4] sm:$0xf]
    %v1482 = vld [vmem:[#allocation2 + $0xe8] sm:$0xf]
    %v1483 = vld [vmem:[#allocation2 + $0xec] sm:$0xf]
    %v1484 = vld [vmem:[#allocation2 + $0xf0] sm:$0xf]
    %v1485 = vld [vmem:[#allocation2 + $0xf4] sm:$0xf]
    %v1486 = vld [vmem:[#allocation2 + $0xf8] sm:$0xf]
    %v1487 = vld [vmem:[#allocation2 + $0xfc] sm:$0xf]
    %v1488 = vld [vmem:[#allocation2 + $0x100] sm:$0xf]
    %v1489 = vld [vmem:[#allocation2 + $0x104] sm:$0xf]
    %v1490 = vld [vmem:[#allocation2 + $0x108] sm:$0xf]
    %v1491 = vld [vmem:[#allocation2 + $0x10c] sm:$0xf]
    %v1492 = vld [vmem:[#allocation2 + $0x110] sm:$0xf]
    %v1493 = vld [vmem:[#allocation2 + $0x114] sm:$0xf]
    %v1494 = vld [vmem:[#allocation2 + $0x118] sm:$0xf]
    %v1495 = vld [vmem:[#allocation2 + $0x11c] sm:$0xf]
    %v1496 = vld [vmem:[#allocation2 + $0x120] sm:$0xf]
    %v1497 = vld [vmem:[#allocation2 + $0x124] sm:$0xf]
    %v1498 = vld [vmem:[#allocation2 + $0x128] sm:$0xf]
    %v1499 = vld [vmem:[#allocation2 + $0x12c] sm:$0xf]
    %v1500 = vld [vmem:[#allocation2 + $0x130] sm:$0xf]
    %v1501 = vld [vmem:[#allocation2 + $0x134] sm:$0xf]
    %v1502 = vld [vmem:[#allocation2 + $0x138] sm:$0xf]
    %v1503 = vld [vmem:[#allocation2 + $0x13c] sm:$0xf]
    %v1504 = vld [vmem:[#allocation2 + $0x140] sm:$0xf]
    %v1505 = vld [vmem:[#allocation2 + $0x144] sm:$0xf]
    %v1506 = vld [vmem:[#allocation2 + $0x148] sm:$0xf]
    %v1507 = vld [vmem:[#allocation2 + $0x14c] sm:$0xf]
    %v1508 = vld [vmem:[#allocation2 + $0x150] sm:$0xf]
    %v1509 = vld [vmem:[#allocation2 + $0x154] sm:$0xf]
    %v1510 = vld [vmem:[#allocation2 + $0x158] sm:$0xf]
    %v1511 = vld [vmem:[#allocation2 + $0x15c] sm:$0xf]
    %v1512 = vld [vmem:[#allocation2 + $0x160] sm:$0xf]
    %v1513 = vld [vmem:[#allocation2 + $0x164] sm:$0xf]
    %v1514 = vld [vmem:[#allocation2 + $0x168] sm:$0xf]
    %v1515 = vld [vmem:[#allocation2 + $0x16c] sm:$0xf]
    %v1516 = vld [vmem:[#allocation2 + $0x170] sm:$0xf]
    %v1517 = vld [vmem:[#allocation2 + $0x174] sm:$0xf]
    %v1518 = vld [vmem:[#allocation2 + $0x178] sm:$0xf]
    %v1519 = vld [vmem:[#allocation2 + $0x17c] sm:$0xf]
    %v1520 = vld [vmem:[#allocation2 + $0x180] sm:$0xf]
    %v1521 = vld [vmem:[#allocation2 + $0x184] sm:$0xf]
    %v1522 = vld [vmem:[#allocation2 + $0x188] sm:$0xf]
    %v1523 = vld [vmem:[#allocation2 + $0x18c] sm:$0xf]
    %v1524 = vld [vmem:[#allocation2 + $0x190] sm:$0xf]
    %v1525 = vld [vmem:[#allocation2 + $0x194] sm:$0xf]
    %v1526 = vld [vmem:[#allocation2 + $0x198] sm:$0xf]
    %v1527 = vld [vmem:[#allocation2 + $0x19c] sm:$0xf]
    %v1528 = vld [vmem:[#allocation2 + $0x1a0] sm:$0xf]
    %v1529 = vld [vmem:[#allocation2 + $0x1a4] sm:$0xf]
    %v1530 = vld [vmem:[#allocation2 + $0x1a8] sm:$0xf]
    %v1531 = vld [vmem:[#allocation2 + $0x1ac] sm:$0xf]
    %v1532 = vld [vmem:[#allocation2 + $0x1b0] sm:$0xf]
    %v1533 = vld [vmem:[#allocation2 + $0x1b4] sm:$0xf]
    %v1534 = vld [vmem:[#allocation2 + $0x1b8] sm:$0xf]
    %v1535 = vld [vmem:[#allocation2 + $0x1bc] sm:$0xf]
    %v1536 = vld [vmem:[#allocation2 + $0x1c0] sm:$0xf]
    %v1537 = vld [vmem:[#allocation2 + $0x1c4] sm:$0xf]
    %v1538 = vld [vmem:[#allocation2 + $0x1c8] sm:$0xf]
    %v1539 = vld [vmem:[#allocation2 + $0x1cc] sm:$0xf]
    %v1540 = vld [vmem:[#allocation2 + $0x1d0] sm:$0xf]
    %v1541 = vld [vmem:[#allocation2 + $0x1d4] sm:$0xf]
    %v1542 = vld [vmem:[#allocation2 + $0x1d8] sm:$0xf]
    %v1543 = vld [vmem:[#allocation2 + $0x1dc] sm:$0xf]
    %v1544 = vld [vmem:[#allocation2 + $0x1e0] sm:$0xf]
    %v1545 = vld [vmem:[#allocation2 + $0x1e4] sm:$0xf]
    %v1546 = vld [vmem:[#allocation2 + $0x1e8] sm:$0xf]
    %v1547 = vld [vmem:[#allocation2 + $0x1ec] sm:$0xf]
    %v1548 = vld [vmem:[#allocation2 + $0x1f0] sm:$0xf]
    %v1549 = vld [vmem:[#allocation2 + $0x1f4] sm:$0xf]
    %v1550 = vld [vmem:[#allocation2 + $0x1f8] sm:$0xf]
    %v1551 = vld [vmem:[#allocation2 + $0x1fc] sm:$0xf]
    %v1552 = vld [vmem:[#allocation2 + $0x200] sm:$0xf]
    %v1553 = vld [vmem:[#allocation2 + $0x204] sm:$0xf]
    %v1554 = vld [vmem:[#allocation2 + $0x208] sm:$0xf]
    %v1555 = vld [vmem:[#allocation2 + $0x20c] sm:$0xf]
    %v1556 = vld [vmem:[#allocation2 + $0x210] sm:$0xf]
    %v1557 = vld [vmem:[#allocation2 + $0x214] sm:$0xf]
    %v1558 = vld [vmem:[#allocation2 + $0x218] sm:$0xf]
    %v1559 = vld [vmem:[#allocation2 + $0x21c] sm:$0xf]
    %v1560 = vld [vmem:[#allocation2 + $0x220] sm:$0xf]
    %v1561 = vld [vmem:[#allocation2 + $0x224] sm:$0xf]
    %v1562 = vld [vmem:[#allocation2 + $0x228] sm:$0xf]
    %v1563 = vld [vmem:[#allocation2 + $0x22c] sm:$0xf]
    %v1564 = vld [vmem:[#allocation2 + $0x230] sm:$0xf]
    %v1565 = vld [vmem:[#allocation2 + $0x234] sm:$0xf]
    %v1566 = vld [vmem:[#allocation2 + $0x238] sm:$0xf]
    %v1567 = vld [vmem:[#allocation2 + $0x23c] sm:$0xf]
    %v1568 = vld [vmem:[#allocation2 + $0x240] sm:$0xf]
    %v1569 = vld [vmem:[#allocation2 + $0x244] sm:$0xf]
    %v1570 = vld [vmem:[#allocation2 + $0x248] sm:$0xf]
    %v1571 = vld [vmem:[#allocation2 + $0x24c] sm:$0xf]
    %v1572 = vld [vmem:[#allocation2 + $0x250] sm:$0xf]
    %v1573 = vld [vmem:[#allocation2 + $0x254] sm:$0xf]
    %v1574 = vld [vmem:[#allocation2 + $0x258] sm:$0xf]
    %v1575 = vld [vmem:[#allocation2 + $0x25c] sm:$0xf]
    %v1576 = vld [vmem:[#allocation2 + $0x260] sm:$0xf]
    %v1577 = vld [vmem:[#allocation2 + $0x264] sm:$0xf]
    %v1578 = vld [vmem:[#allocation2 + $0x268] sm:$0xf]
    %v1579 = vld [vmem:[#allocation2 + $0x26c] sm:$0xf]
    %v1580 = vld [vmem:[#allocation2 + $0x270] sm:$0xf]
    %v1581 = vld [vmem:[#allocation2 + $0x274] sm:$0xf]
    %v1582 = vld [vmem:[#allocation2 + $0x278] sm:$0xf]
    %v1583 = vld [vmem:[#allocation2 + $0x27c] sm:$0xf]
    %v1584 = vld [vmem:[#allocation2 + $0x280] sm:$0xf]
    %v1585 = vld [vmem:[#allocation2 + $0x284] sm:$0xf]
    %v1586 = vld [vmem:[#allocation2 + $0x288] sm:$0xf]
    %v1587 = vld [vmem:[#allocation2 + $0x28c] sm:$0xf]
    %v1588 = vld [vmem:[#allocation2 + $0x290] sm:$0xf]
    %v1589 = vld [vmem:[#allocation2 + $0x294] sm:$0xf]
    %v1590 = vld [vmem:[#allocation2 + $0x298] sm:$0xf]
    %v1591 = vld [vmem:[#allocation2 + $0x29c] sm:$0xf]
    %v1592 = vld [vmem:[#allocation2 + $0x2a0] sm:$0xf]
    %v1593 = vld [vmem:[#allocation2 + $0x2a4] sm:$0xf]
    %v1594 = vld [vmem:[#allocation2 + $0x2a8] sm:$0xf]
    %v1595 = vld [vmem:[#allocation2 + $0x2ac] sm:$0xf]
    %v1596 = vld [vmem:[#allocation2 + $0x2b0] sm:$0xf]
    %v1597 = vld [vmem:[#allocation2 + $0x2b4] sm:$0xf]
    %v1598 = vld [vmem:[#allocation2 + $0x2b8] sm:$0xf]
    %v1599 = vld [vmem:[#allocation2 + $0x2bc] sm:$0xf]
    %v1600 = vld [vmem:[#allocation2 + $0x2c0] sm:$0xf]
    %v1601 = vld [vmem:[#allocation2 + $0x2c4] sm:$0xf]
    %v1602 = vld [vmem:[#allocation2 + $0x2c8] sm:$0xf]
    %v1603 = vld [vmem:[#allocation2 + $0x2cc] sm:$0xf]
    %v1604 = vld [vmem:[#allocation2 + $0x2d0] sm:$0xf]
    %v1605 = vld [vmem:[#allocation2 + $0x2d4] sm:$0xf]
    %v1606 = vld [vmem:[#allocation2 + $0x2d8] sm:$0xf]
    %v1607 = vld [vmem:[#allocation2 + $0x2dc] sm:$0xf]
    %v1608 = vld [vmem:[#allocation2 + $0x2e0] sm:$0xf]
    %v1609 = vld [vmem:[#allocation2 + $0x2e4] sm:$0xf]
    %v1610 = vld [vmem:[#allocation2 + $0x2e8] sm:$0xf]
    %v1611 = vld [vmem:[#allocation2 + $0x2ec] sm:$0xf]
    %v1612 = vld [vmem:[#allocation2 + $0x2f0] sm:$0xf]
    %v1613 = vld [vmem:[#allocation2 + $0x2f4] sm:$0xf]
    %v1614 = vld [vmem:[#allocation2 + $0x2f8] sm:$0xf]
    %v1615 = vld [vmem:[#allocation2 + $0x2fc] sm:$0xf]
    %v1616 = vld [vmem:[#allocation2 + $0x300] sm:$0xf]
    %v1617 = vld [vmem:[#allocation2 + $0x304] sm:$0xf]
    %v1618 = vld [vmem:[#allocation2 + $0x308] sm:$0xf]
    %v1619 = vld [vmem:[#allocation2 + $0x30c] sm:$0xf]
    %v1620 = vld [vmem:[#allocation2 + $0x310] sm:$0xf]
    %v1621 = vld [vmem:[#allocation2 + $0x314] sm:$0xf]
    %v1622 = vld [vmem:[#allocation2 + $0x318] sm:$0xf]
    %v1623 = vld [vmem:[#allocation2 + $0x31c] sm:$0xf]
    %v1624 = vld [vmem:[#allocation2 + $0x320] sm:$0xf]
    %v1625 = vld [vmem:[#allocation2 + $0x324] sm:$0xf]
    %v1626 = vld [vmem:[#allocation2 + $0x328] sm:$0xf]
    %v1627 = vld [vmem:[#allocation2 + $0x32c] sm:$0xf]
    %v1628 = vld [vmem:[#allocation2 + $0x330] sm:$0xf]
    %v1629 = vld [vmem:[#allocation2 + $0x334] sm:$0xf]
    %v1630 = vld [vmem:[#allocation2 + $0x338] sm:$0xf]
    %v1631 = vld [vmem:[#allocation2 + $0x33c] sm:$0xf]
    %v1632 = vld [vmem:[#allocation2 + $0x340] sm:$0xf]
    %v1633 = vld [vmem:[#allocation2 + $0x344] sm:$0xf]
    %v1634 = vld [vmem:[#allocation2 + $0x348] sm:$0xf]
    %v1635 = vld [vmem:[#allocation2 + $0x34c] sm:$0xf]
    %v1636 = vld [vmem:[#allocation2 + $0x350] sm:$0xf]
    %v1637 = vld [vmem:[#allocation2 + $0x354] sm:$0xf]
    %v1638 = vld [vmem:[#allocation2 + $0x358] sm:$0xf]
    %v1639 = vld [vmem:[#allocation2 + $0x35c] sm:$0xf]
    %v1640 = vld [vmem:[#allocation2 + $0x360] sm:$0xf]
    %v1641 = vld [vmem:[#allocation2 + $0x364] sm:$0xf]
    %v1642 = vld [vmem:[#allocation2 + $0x368] sm:$0xf]
    %v1643 = vld [vmem:[#allocation2 + $0x36c] sm:$0xf]
    %v1644 = vld [vmem:[#allocation2 + $0x370] sm:$0xf]
    %v1645 = vld [vmem:[#allocation2 + $0x374] sm:$0xf]
    %v1646 = vld [vmem:[#allocation2 + $0x378] sm:$0xf]
    %v1647 = vld [vmem:[#allocation2 + $0x37c] sm:$0xf]
    %v1648 = vld [vmem:[#allocation2 + $0x380] sm:$0xf]
    %v1649 = vld [vmem:[#allocation2 + $0x384] sm:$0xf]
    %v1650 = vld [vmem:[#allocation2 + $0x388] sm:$0xf]
    %v1651 = vld [vmem:[#allocation2 + $0x38c] sm:$0xf]
    %v1652 = vld [vmem:[#allocation2 + $0x390] sm:$0xf]
    %v1653 = vld [vmem:[#allocation2 + $0x394] sm:$0xf]
    %v1654 = vld [vmem:[#allocation2 + $0x398] sm:$0xf]
    %v1655 = vld [vmem:[#allocation2 + $0x39c] sm:$0xf]
    %v1656 = vld [vmem:[#allocation2 + $0x3a0] sm:$0xf]
    %v1657 = vld [vmem:[#allocation2 + $0x3a4] sm:$0xf]
    %v1658 = vld [vmem:[#allocation2 + $0x3a8] sm:$0xf]
    %v1659 = vld [vmem:[#allocation2 + $0x3ac] sm:$0xf]
    %v1660 = vld [vmem:[#allocation2 + $0x3b0] sm:$0xf]
    %v1661 = vld [vmem:[#allocation2 + $0x3b4] sm:$0xf]
    %v1662 = vld [vmem:[#allocation2 + $0x3b8] sm:$0xf]
    %v1663 = vld [vmem:[#allocation2 + $0x3bc] sm:$0xf]
    %v1664 = vld [vmem:[#allocation2 + $0x3c0] sm:$0xf]
    %v1665 = vld [vmem:[#allocation2 + $0x3c4] sm:$0xf]
    %v1666 = vld [vmem:[#allocation2 + $0x3c8] sm:$0xf]
    %v1667 = vld [vmem:[#allocation2 + $0x3cc] sm:$0xf]
    %v1668 = vld [vmem:[#allocation2 + $0x3d0] sm:$0xf]
    %v1669 = vld [vmem:[#allocation2 + $0x3d4] sm:$0xf]
    %v1670 = vld [vmem:[#allocation2 + $0x3d8] sm:$0xf]
    %v1671 = vld [vmem:[#allocation2 + $0x3dc] sm:$0xf]
    %v1672 = vld [vmem:[#allocation2 + $0x3e0] sm:$0xf]
    %v1673 = vld [vmem:[#allocation2 + $0x3e4] sm:$0xf]
    %v1674 = vld [vmem:[#allocation2 + $0x3e8] sm:$0xf]
    %v1675 = vld [vmem:[#allocation2 + $0x3ec] sm:$0xf]
    %v1676 = vld [vmem:[#allocation2 + $0x3f0] sm:$0xf]
    %v1677 = vld [vmem:[#allocation2 + $0x3f4] sm:$0xf]
    %v1678 = vld [vmem:[#allocation2 + $0x3f8] sm:$0xf]
    %v1679 = vld [vmem:[#allocation2 + $0x3fc] sm:$0xf]
    %v1680 = vunpack.c.l.bf16 %v1424
    %v1681 = vunpack.c.l.bf16 %v1425
    %v1682 = vunpack.c.l.bf16 %v1426
    %v1683 = vunpack.c.l.bf16 %v1427
    %v1684 = vunpack.c.l.bf16 %v1428
    %v1685 = vunpack.c.l.bf16 %v1429
    %v1686 = vunpack.c.l.bf16 %v1430
    %v1687 = vunpack.c.l.bf16 %v1431
    %v1688 = vunpack.c.l.bf16 %v1432
    %v1689 = vunpack.c.l.bf16 %v1433
    %v1690 = vunpack.c.l.bf16 %v1434
    %v1691 = vunpack.c.l.bf16 %v1435
    %v1692 = vunpack.c.l.bf16 %v1436
    %v1693 = vunpack.c.l.bf16 %v1437
    %v1694 = vunpack.c.l.bf16 %v1438
    %v1695 = vunpack.c.l.bf16 %v1439
    %v1696 = vunpack.c.l.bf16 %v1440
    %v1697 = vunpack.c.l.bf16 %v1441
    %v1698 = vunpack.c.l.bf16 %v1442
    %v1699 = vunpack.c.l.bf16 %v1443
    %v1700 = vunpack.c.l.bf16 %v1444
    %v1701 = vunpack.c.l.bf16 %v1445
    %v1702 = vunpack.c.l.bf16 %v1446
    %v1703 = vunpack.c.l.bf16 %v1447
    %v1704 = vunpack.c.l.bf16 %v1448
    %v1705 = vunpack.c.l.bf16 %v1449
    %v1706 = vunpack.c.l.bf16 %v1450
    %v1707 = vunpack.c.l.bf16 %v1451
    %v1708 = vunpack.c.l.bf16 %v1452
    %v1709 = vunpack.c.l.bf16 %v1453
    %v1710 = vunpack.c.l.bf16 %v1454
    %v1711 = vunpack.c.l.bf16 %v1455
    %v1712 = vunpack.c.l.bf16 %v1456
    %v1713 = vunpack.c.l.bf16 %v1457
    %v1714 = vunpack.c.l.bf16 %v1458
    %v1715 = vunpack.c.l.bf16 %v1459
    %v1716 = vunpack.c.l.bf16 %v1460
    %v1717 = vunpack.c.l.bf16 %v1461
    %v1718 = vunpack.c.l.bf16 %v1462
    %v1719 = vunpack.c.l.bf16 %v1463
    %v1720 = vunpack.c.l.bf16 %v1464
    %v1721 = vunpack.c.l.bf16 %v1465
    %v1722 = vunpack.c.l.bf16 %v1466
    %v1723 = vunpack.c.l.bf16 %v1467
    %v1724 = vunpack.c.l.bf16 %v1468
    %v1725 = vunpack.c.l.bf16 %v1469
    %v1726 = vunpack.c.l.bf16 %v1470
    %v1727 = vunpack.c.l.bf16 %v1471
    %v1728 = vunpack.c.l.bf16 %v1472
    %v1729 = vunpack.c.l.bf16 %v1473
    %v1730 = vunpack.c.l.bf16 %v1474
    %v1731 = vunpack.c.l.bf16 %v1475
    %v1732 = vunpack.c.l.bf16 %v1476
    %v1733 = vunpack.c.l.bf16 %v1477
    %v1734 = vunpack.c.l.bf16 %v1478
    %v1735 = vunpack.c.l.bf16 %v1479
    %v1736 = vunpack.c.l.bf16 %v1480
    %v1737 = vunpack.c.l.bf16 %v1481
    %v1738 = vunpack.c.l.bf16 %v1482
    %v1739 = vunpack.c.l.bf16 %v1483
    %v1740 = vunpack.c.l.bf16 %v1484
    %v1741 = vunpack.c.l.bf16 %v1485
    %v1742 = vunpack.c.l.bf16 %v1486
    %v1743 = vunpack.c.l.bf16 %v1487
    %v1744 = vunpack.c.l.bf16 %v1488
    %v1745 = vunpack.c.l.bf16 %v1489
    %v1746 = vunpack.c.l.bf16 %v1490
    %v1747 = vunpack.c.l.bf16 %v1491
    %v1748 = vunpack.c.l.bf16 %v1492
    %v1749 = vunpack.c.l.bf16 %v1493
    %v1750 = vunpack.c.l.bf16 %v1494
    %v1751 = vunpack.c.l.bf16 %v1495
    %v1752 = vunpack.c.l.bf16 %v1496
    %v1753 = vunpack.c.l.bf16 %v1497
    %v1754 = vunpack.c.l.bf16 %v1498
    %v1755 = vunpack.c.l.bf16 %v1499
    %v1756 = vunpack.c.l.bf16 %v1500
    %v1757 = vunpack.c.l.bf16 %v1501
    %v1758 = vunpack.c.l.bf16 %v1502
    %v1759 = vunpack.c.l.bf16 %v1503
    %v1760 = vunpack.c.l.bf16 %v1504
    %v1761 = vunpack.c.l.bf16 %v1505
    %v1762 = vunpack.c.l.bf16 %v1506
    %v1763 = vunpack.c.l.bf16 %v1507
    %v1764 = vunpack.c.l.bf16 %v1508
    %v1765 = vunpack.c.l.bf16 %v1509
    %v1766 = vunpack.c.l.bf16 %v1510
    %v1767 = vunpack.c.l.bf16 %v1511
    %v1768 = vunpack.c.l.bf16 %v1512
    %v1769 = vunpack.c.l.bf16 %v1513
    %v1770 = vunpack.c.l.bf16 %v1514
    %v1771 = vunpack.c.l.bf16 %v1515
    %v1772 = vunpack.c.l.bf16 %v1516
    %v1773 = vunpack.c.l.bf16 %v1517
    %v1774 = vunpack.c.l.bf16 %v1518
    %v1775 = vunpack.c.l.bf16 %v1519
    %v1776 = vunpack.c.l.bf16 %v1520
    %v1777 = vunpack.c.l.bf16 %v1521
    %v1778 = vunpack.c.l.bf16 %v1522
    %v1779 = vunpack.c.l.bf16 %v1523
    %v1780 = vunpack.c.l.bf16 %v1524
    %v1781 = vunpack.c.l.bf16 %v1525
    %v1782 = vunpack.c.l.bf16 %v1526
    %v1783 = vunpack.c.l.bf16 %v1527
    %v1784 = vunpack.c.l.bf16 %v1528
    %v1785 = vunpack.c.l.bf16 %v1529
    %v1786 = vunpack.c.l.bf16 %v1530
    %v1787 = vunpack.c.l.bf16 %v1531
    %v1788 = vunpack.c.l.bf16 %v1532
    %v1789 = vunpack.c.l.bf16 %v1533
    %v1790 = vunpack.c.l.bf16 %v1534
    %v1791 = vunpack.c.l.bf16 %v1535
    %v1792 = vunpack.c.l.bf16 %v1536
    %v1793 = vunpack.c.l.bf16 %v1537
    %v1794 = vunpack.c.l.bf16 %v1538
    %v1795 = vunpack.c.l.bf16 %v1539
    %v1796 = vunpack.c.l.bf16 %v1540
    %v1797 = vunpack.c.l.bf16 %v1541
    %v1798 = vunpack.c.l.bf16 %v1542
    %v1799 = vunpack.c.l.bf16 %v1543
    %v1800 = vunpack.c.l.bf16 %v1544
    %v1801 = vunpack.c.l.bf16 %v1545
    %v1802 = vunpack.c.l.bf16 %v1546
    %v1803 = vunpack.c.l.bf16 %v1547
    %v1804 = vunpack.c.l.bf16 %v1548
    %v1805 = vunpack.c.l.bf16 %v1549
    %v1806 = vunpack.c.l.bf16 %v1550
    %v1807 = vunpack.c.l.bf16 %v1551
    %v1808 = vunpack.c.l.bf16 %v1552
    %v1809 = vunpack.c.l.bf16 %v1553
    %v1810 = vunpack.c.l.bf16 %v1554
    %v1811 = vunpack.c.l.bf16 %v1555
    %v1812 = vunpack.c.l.bf16 %v1556
    %v1813 = vunpack.c.l.bf16 %v1557
    %v1814 = vunpack.c.l.bf16 %v1558
    %v1815 = vunpack.c.l.bf16 %v1559
    %v1816 = vunpack.c.l.bf16 %v1560
    %v1817 = vunpack.c.l.bf16 %v1561
    %v1818 = vunpack.c.l.bf16 %v1562
    %v1819 = vunpack.c.l.bf16 %v1563
    %v1820 = vunpack.c.l.bf16 %v1564
    %v1821 = vunpack.c.l.bf16 %v1565
    %v1822 = vunpack.c.l.bf16 %v1566
    %v1823 = vunpack.c.l.bf16 %v1567
    %v1824 = vunpack.c.l.bf16 %v1568
    %v1825 = vunpack.c.l.bf16 %v1569
    %v1826 = vunpack.c.l.bf16 %v1570
    %v1827 = vunpack.c.l.bf16 %v1571
    %v1828 = vunpack.c.l.bf16 %v1572
    %v1829 = vunpack.c.l.bf16 %v1573
    %v1830 = vunpack.c.l.bf16 %v1574
    %v1831 = vunpack.c.l.bf16 %v1575
    %v1832 = vunpack.c.l.bf16 %v1576
    %v1833 = vunpack.c.l.bf16 %v1577
    %v1834 = vunpack.c.l.bf16 %v1578
    %v1835 = vunpack.c.l.bf16 %v1579
    %v1836 = vunpack.c.l.bf16 %v1580
    %v1837 = vunpack.c.l.bf16 %v1581
    %v1838 = vunpack.c.l.bf16 %v1582
    %v1839 = vunpack.c.l.bf16 %v1583
    %v1840 = vunpack.c.l.bf16 %v1584
    %v1841 = vunpack.c.l.bf16 %v1585
    %v1842 = vunpack.c.l.bf16 %v1586
    %v1843 = vunpack.c.l.bf16 %v1587
    %v1844 = vunpack.c.l.bf16 %v1588
    %v1845 = vunpack.c.l.bf16 %v1589
    %v1846 = vunpack.c.l.bf16 %v1590
    %v1847 = vunpack.c.l.bf16 %v1591
    %v1848 = vunpack.c.l.bf16 %v1592
    %v1849 = vunpack.c.l.bf16 %v1593
    %v1850 = vunpack.c.l.bf16 %v1594
    %v1851 = vunpack.c.l.bf16 %v1595
    %v1852 = vunpack.c.l.bf16 %v1596
    %v1853 = vunpack.c.l.bf16 %v1597
    %v1854 = vunpack.c.l.bf16 %v1598
    %v1855 = vunpack.c.l.bf16 %v1599
    %v1856 = vunpack.c.l.bf16 %v1600
    %v1857 = vunpack.c.l.bf16 %v1601
    %v1858 = vunpack.c.l.bf16 %v1602
    %v1859 = vunpack.c.l.bf16 %v1603
    %v1860 = vunpack.c.l.bf16 %v1604
    %v1861 = vunpack.c.l.bf16 %v1605
    %v1862 = vunpack.c.l.bf16 %v1606
    %v1863 = vunpack.c.l.bf16 %v1607
    %v1864 = vunpack.c.l.bf16 %v1608
    %v1865 = vunpack.c.l.bf16 %v1609
    %v1866 = vunpack.c.l.bf16 %v1610
    %v1867 = vunpack.c.l.bf16 %v1611
    %v1868 = vunpack.c.l.bf16 %v1612
    %v1869 = vunpack.c.l.bf16 %v1613
    %v1870 = vunpack.c.l.bf16 %v1614
    %v1871 = vunpack.c.l.bf16 %v1615
    %v1872 = vunpack.c.l.bf16 %v1616
    %v1873 = vunpack.c.l.bf16 %v1617
    %v1874 = vunpack.c.l.bf16 %v1618
    %v1875 = vunpack.c.l.bf16 %v1619
    %v1876 = vunpack.c.l.bf16 %v1620
    %v1877 = vunpack.c.l.bf16 %v1621
    %v1878 = vunpack.c.l.bf16 %v1622
    %v1879 = vunpack.c.l.bf16 %v1623
    %v1880 = vunpack.c.l.bf16 %v1624
    %v1881 = vunpack.c.l.bf16 %v1625
    %v1882 = vunpack.c.l.bf16 %v1626
    %v1883 = vunpack.c.l.bf16 %v1627
    %v1884 = vunpack.c.l.bf16 %v1628
    %v1885 = vunpack.c.l.bf16 %v1629
    %v1886 = vunpack.c.l.bf16 %v1630
    %v1887 = vunpack.c.l.bf16 %v1631
    %v1888 = vunpack.c.l.bf16 %v1632
    %v1889 = vunpack.c.l.bf16 %v1633
    %v1890 = vunpack.c.l.bf16 %v1634
    %v1891 = vunpack.c.l.bf16 %v1635
    %v1892 = vunpack.c.l.bf16 %v1636
    %v1893 = vunpack.c.l.bf16 %v1637
    %v1894 = vunpack.c.l.bf16 %v1638
    %v1895 = vunpack.c.l.bf16 %v1639
    %v1896 = vunpack.c.l.bf16 %v1640
    %v1897 = vunpack.c.l.bf16 %v1641
    %v1898 = vunpack.c.l.bf16 %v1642
    %v1899 = vunpack.c.l.bf16 %v1643
    %v1900 = vunpack.c.l.bf16 %v1644
    %v1901 = vunpack.c.l.bf16 %v1645
    %v1902 = vunpack.c.l.bf16 %v1646
    %v1903 = vunpack.c.l.bf16 %v1647
    %v1904 = vunpack.c.l.bf16 %v1648
    %v1905 = vunpack.c.l.bf16 %v1649
    %v1906 = vunpack.c.l.bf16 %v1650
    %v1907 = vunpack.c.l.bf16 %v1651
    %v1908 = vunpack.c.l.bf16 %v1652
    %v1909 = vunpack.c.l.bf16 %v1653
    %v1910 = vunpack.c.l.bf16 %v1654
    %v1911 = vunpack.c.l.bf16 %v1655
    %v1912 = vunpack.c.l.bf16 %v1656
    %v1913 = vunpack.c.l.bf16 %v1657
    %v1914 = vunpack.c.l.bf16 %v1658
    %v1915 = vunpack.c.l.bf16 %v1659
    %v1916 = vunpack.c.l.bf16 %v1660
    %v1917 = vunpack.c.l.bf16 %v1661
    %v1918 = vunpack.c.l.bf16 %v1662
    %v1919 = vunpack.c.l.bf16 %v1663
    %v1920 = vunpack.c.l.bf16 %v1664
    %v1921 = vunpack.c.l.bf16 %v1665
    %v1922 = vunpack.c.l.bf16 %v1666
    %v1923 = vunpack.c.l.bf16 %v1667
    %v1924 = vunpack.c.l.bf16 %v1668
    %v1925 = vunpack.c.l.bf16 %v1669
    %v1926 = vunpack.c.l.bf16 %v1670
    %v1927 = vunpack.c.l.bf16 %v1671
    %v1928 = vunpack.c.l.bf16 %v1672
    %v1929 = vunpack.c.l.bf16 %v1673
    %v1930 = vunpack.c.l.bf16 %v1674
    %v1931 = vunpack.c.l.bf16 %v1675
    %v1932 = vunpack.c.l.bf16 %v1676
    %v1933 = vunpack.c.l.bf16 %v1677
    %v1934 = vunpack.c.l.bf16 %v1678
    %v1935 = vunpack.c.l.bf16 %v1679
    %v1936 = vld [vmem:[%s12] sm:$0x1]
    %v1938 = vlaneseq
    %v1939 = vshrl.u32 %v1938, 7
    %v1940 = vsub.s32 0, %v1939
    %v1941 = vrot.slane %v1936, %v1940
    %1943 = vmatprep.subr.mxu0 0.0
    %1944 = vmatpush1.msra.mxu0 %v1680
    %1945 = vmatprep.subr.mxu0 0.0
    %1946 = vmatpush1.msra.mxu0 %v1681
    %1947 = vmatprep.subr.mxu0 0.0
    %1948 = vmatpush1.msra.mxu0 %v1682
    %1949 = vmatprep.subr.mxu0 0.0
    %1950 = vmatpush1.msra.mxu0 %v1683
    %1951 = vmatprep.subr.mxu0 0.0
    %1952 = vmatpush1.msra.mxu0 %v1684
    %1953 = vmatprep.subr.mxu0 0.0
    %1954 = vmatpush1.msra.mxu0 %v1685
    %1955 = vmatprep.subr.mxu0 0.0
    %1956 = vmatpush1.msra.mxu0 %v1686
    %1957 = vmatprep.subr.mxu0 0.0
    %1958 = vmatpush1.msra.mxu0 %v1687
    %1959 = vmatprep.subr.mxu0 0.0
    %1960 = vmatpush1.msra.mxu0 %v1688
    %1961 = vmatprep.subr.mxu0 0.0
    %1962 = vmatpush1.msra.mxu0 %v1689
    %1963 = vmatprep.subr.mxu0 0.0
    %1964 = vmatpush1.msra.mxu0 %v1690
    %1965 = vmatprep.subr.mxu0 0.0
    %1966 = vmatpush1.msra.mxu0 %v1691
    %1967 = vmatprep.subr.mxu0 0.0
    %1968 = vmatpush1.msra.mxu0 %v1692
    %1969 = vmatprep.subr.mxu0 0.0
    %1970 = vmatpush1.msra.mxu0 %v1693
    %1971 = vmatprep.subr.mxu0 0.0
    %1972 = vmatpush1.msra.mxu0 %v1694
    %1973 = vmatprep.subr.mxu0 0.0
    %1974 = vmatpush1.msra.mxu0 %v1695
    %1975 = vmatprep.subr.mxu0 0.0
    %1976 = vmatpush1.msra.mxu0 %v1696
    %1977 = vmatprep.subr.mxu0 0.0
    %1978 = vmatpush1.msra.mxu0 %v1697
    %1979 = vmatprep.subr.mxu0 0.0
    %1980 = vmatpush1.msra.mxu0 %v1698
    %1981 = vmatprep.subr.mxu0 0.0
    %1982 = vmatpush1.msra.mxu0 %v1699
    %1983 = vmatprep.subr.mxu0 0.0
    %1984 = vmatpush1.msra.mxu0 %v1700
    %1985 = vmatprep.subr.mxu0 0.0
    %1986 = vmatpush1.msra.mxu0 %v1701
    %1987 = vmatprep.subr.mxu0 0.0
    %1988 = vmatpush1.msra.mxu0 %v1702
    %1989 = vmatprep.subr.mxu0 0.0
    %1990 = vmatpush1.msra.mxu0 %v1703
    %1991 = vmatprep.subr.mxu0 0.0
    %1992 = vmatpush1.msra.mxu0 %v1704
    %1993 = vmatprep.subr.mxu0 0.0
    %1994 = vmatpush1.msra.mxu0 %v1705
    %1995 = vmatprep.subr.mxu0 0.0
    %1996 = vmatpush1.msra.mxu0 %v1706
    %1997 = vmatprep.subr.mxu0 0.0
    %1998 = vmatpush1.msra.mxu0 %v1707
    %1999 = vmatprep.subr.mxu0 0.0
    %2000 = vmatpush1.msra.mxu0 %v1708
    %2001 = vmatprep.subr.mxu0 0.0
    %2002 = vmatpush1.msra.mxu0 %v1709
    %2003 = vmatprep.subr.mxu0 0.0
    %2004 = vmatpush1.msra.mxu0 %v1710
    %2005 = vmatprep.subr.mxu0 0.0
    %2006 = vmatpush1.msra.mxu0 %v1711
    %2007 = vmatprep.mubr.f32.mxu0 %v1409
    %2008 = vmatmul.mubr.f32.gmra.mrb[0].mxu0 %v1408
    %v2009 = vpop.f32.mrb[0].mxu0
    %v2010 = vadd.f32 %v1941, %v2009
    %v2011 = vpop.f32.mrb[0].mxu0
    %2012 = vdwg.mxu0
    %2013 = vmatprep.subr.mxu0 0.0
    %2014 = vmatpush1.msra.mxu0 %v1712
    %2015 = vmatprep.subr.mxu0 0.0
    %2016 = vmatpush1.msra.mxu0 %v1713
    %2017 = vmatprep.subr.mxu0 0.0
    %2018 = vmatpush1.msra.mxu0 %v1714
    %2019 = vmatprep.subr.mxu0 0.0
    %2020 = vmatpush1.msra.mxu0 %v1715
    %2021 = vmatprep.subr.mxu0 0.0
    %2022 = vmatpush1.msra.mxu0 %v1716
    %2023 = vmatprep.subr.mxu0 0.0
    %2024 = vmatpush1.msra.mxu0 %v1717
    %2025 = vmatprep.subr.mxu0 0.0
    %2026 = vmatpush1.msra.mxu0 %v1718
    %2027 = vmatprep.subr.mxu0 0.0
    %2028 = vmatpush1.msra.mxu0 %v1719
    %2029 = vmatprep.subr.mxu0 0.0
    %2030 = vmatpush1.msra.mxu0 %v1720
    %2031 = vmatprep.subr.mxu0 0.0
    %2032 = vmatpush1.msra.mxu0 %v1721
    %2033 = vmatprep.subr.mxu0 0.0
    %2034 = vmatpush1.msra.mxu0 %v1722
    %2035 = vmatprep.subr.mxu0 0.0
    %2036 = vmatpush1.msra.mxu0 %v1723
    %2037 = vmatprep.subr.mxu0 0.0
    %2038 = vmatpush1.msra.mxu0 %v1724
    %2039 = vmatprep.subr.mxu0 0.0
    %2040 = vmatpush1.msra.mxu0 %v1725
    %2041 = vmatprep.subr.mxu0 0.0
    %2042 = vmatpush1.msra.mxu0 %v1726
    %2043 = vmatprep.subr.mxu0 0.0
    %2044 = vmatpush1.msra.mxu0 %v1727
    %2045 = vmatprep.subr.mxu0 0.0
    %2046 = vmatpush1.msra.mxu0 %v1728
    %2047 = vmatprep.subr.mxu0 0.0
    %2048 = vmatpush1.msra.mxu0 %v1729
    %2049 = vmatprep.subr.mxu0 0.0
    %2050 = vmatpush1.msra.mxu0 %v1730
    %2051 = vmatprep.subr.mxu0 0.0
    %2052 = vmatpush1.msra.mxu0 %v1731
    %2053 = vmatprep.subr.mxu0 0.0
    %2054 = vmatpush1.msra.mxu0 %v1732
    %2055 = vmatprep.subr.mxu0 0.0
    %2056 = vmatpush1.msra.mxu0 %v1733
    %2057 = vmatprep.subr.mxu0 0.0
    %2058 = vmatpush1.msra.mxu0 %v1734
    %2059 = vmatprep.subr.mxu0 0.0
    %2060 = vmatpush1.msra.mxu0 %v1735
    %2061 = vmatprep.subr.mxu0 0.0
    %2062 = vmatpush1.msra.mxu0 %v1736
    %2063 = vmatprep.subr.mxu0 0.0
    %2064 = vmatpush1.msra.mxu0 %v1737
    %2065 = vmatprep.subr.mxu0 0.0
    %2066 = vmatpush1.msra.mxu0 %v1738
    %2067 = vmatprep.subr.mxu0 0.0
    %2068 = vmatpush1.msra.mxu0 %v1739
    %2069 = vmatprep.subr.mxu0 0.0
    %2070 = vmatpush1.msra.mxu0 %v1740
    %2071 = vmatprep.subr.mxu0 0.0
    %2072 = vmatpush1.msra.mxu0 %v1741
    %2073 = vmatprep.subr.mxu0 0.0
    %2074 = vmatpush1.msra.mxu0 %v1742
    %2075 = vmatprep.subr.mxu0 0.0
    %2076 = vmatpush1.msra.mxu0 %v1743
    %2077 = vmatprep.mubr.f32.mxu0 %v1411
    %2078 = vmatmul.mubr.f32.gmra.mrb[0].mxu0 %v1410
    %v2079 = vpop.f32.mrb[0].mxu0
    %v2080 = vadd.f32 %v2010, %v2079
    %v2081 = vpop.f32.mrb[0].mxu0
    %2082 = vdwg.mxu0
    %2083 = vmatprep.subr.mxu0 0.0
    %2084 = vmatpush1.msra.mxu0 %v1744
    %2085 = vmatprep.subr.mxu0 0.0
    %2086 = vmatpush1.msra.mxu0 %v1745
    %2087 = vmatprep.subr.mxu0 0.0
    %2088 = vmatpush1.msra.mxu0 %v1746
    %2089 = vmatprep.subr.mxu0 0.0
    %2090 = vmatpush1.msra.mxu0 %v1747
    %2091 = vmatprep.subr.mxu0 0.0
    %2092 = vmatpush1.msra.mxu0 %v1748
    %2093 = vmatprep.subr.mxu0 0.0
    %2094 = vmatpush1.msra.mxu0 %v1749
    %2095 = vmatprep.subr.mxu0 0.0
    %2096 = vmatpush1.msra.mxu0 %v1750
    %2097 = vmatprep.subr.mxu0 0.0
    %2098 = vmatpush1.msra.mxu0 %v1751
    %2099 = vmatprep.subr.mxu0 0.0
    %2100 = vmatpush1.msra.mxu0 %v1752
    %2101 = vmatprep.subr.mxu0 0.0
    %2102 = vmatpush1.msra.mxu0 %v1753
    %2103 = vmatprep.subr.mxu0 0.0
    %2104 = vmatpush1.msra.mxu0 %v1754
    %2105 = vmatprep.subr.mxu0 0.0
    %2106 = vmatpush1.msra.mxu0 %v1755
    %2107 = vmatprep.subr.mxu0 0.0
    %2108 = vmatpush1.msra.mxu0 %v1756
    %2109 = vmatprep.subr.mxu0 0.0
    %2110 = vmatpush1.msra.mxu0 %v1757
    %2111 = vmatprep.subr.mxu0 0.0
    %2112 = vmatpush1.msra.mxu0 %v1758
    %2113 = vmatprep.subr.mxu0 0.0
    %2114 = vmatpush1.msra.mxu0 %v1759
    %2115 = vmatprep.subr.mxu0 0.0
    %2116 = vmatpush1.msra.mxu0 %v1760
    %2117 = vmatprep.subr.mxu0 0.0
    %2118 = vmatpush1.msra.mxu0 %v1761
    %2119 = vmatprep.subr.mxu0 0.0
    %2120 = vmatpush1.msra.mxu0 %v1762
    %2121 = vmatprep.subr.mxu0 0.0
    %2122 = vmatpush1.msra.mxu0 %v1763
    %2123 = vmatprep.subr.mxu0 0.0
    %2124 = vmatpush1.msra.mxu0 %v1764
    %2125 = vmatprep.subr.mxu0 0.0
    %2126 = vmatpush1.msra.mxu0 %v1765
    %2127 = vmatprep.subr.mxu0 0.0
    %2128 = vmatpush1.msra.mxu0 %v1766
    %2129 = vmatprep.subr.mxu0 0.0
    %2130 = vmatpush1.msra.mxu0 %v1767
    %2131 = vmatprep.subr.mxu0 0.0
    %2132 = vmatpush1.msra.mxu0 %v1768
    %2133 = vmatprep.subr.mxu0 0.0
    %2134 = vmatpush1.msra.mxu0 %v1769
    %2135 = vmatprep.subr.mxu0 0.0
    %2136 = vmatpush1.msra.mxu0 %v1770
    %2137 = vmatprep.subr.mxu0 0.0
    %2138 = vmatpush1.msra.mxu0 %v1771
    %2139 = vmatprep.subr.mxu0 0.0
    %2140 = vmatpush1.msra.mxu0 %v1772
    %2141 = vmatprep.subr.mxu0 0.0
    %2142 = vmatpush1.msra.mxu0 %v1773
    %2143 = vmatprep.subr.mxu0 0.0
    %2144 = vmatpush1.msra.mxu0 %v1774
    %2145 = vmatprep.subr.mxu0 0.0
    %2146 = vmatpush1.msra.mxu0 %v1775
    %2147 = vmatprep.mubr.f32.mxu0 %v1413
    %2148 = vmatmul.mubr.f32.gmra.mrb[0].mxu0 %v1412
    %v2149 = vpop.f32.mrb[0].mxu0
    %v2150 = vadd.f32 %v2080, %v2149
    %v2151 = vpop.f32.mrb[0].mxu0
    %2152 = vdwg.mxu0
    %2153 = vmatprep.subr.mxu0 0.0
    %2154 = vmatpush1.msra.mxu0 %v1776
    %2155 = vmatprep.subr.mxu0 0.0
    %2156 = vmatpush1.msra.mxu0 %v1777
    %2157 = vmatprep.subr.mxu0 0.0
    %2158 = vmatpush1.msra.mxu0 %v1778
    %2159 = vmatprep.subr.mxu0 0.0
    %2160 = vmatpush1.msra.mxu0 %v1779
    %2161 = vmatprep.subr.mxu0 0.0
    %2162 = vmatpush1.msra.mxu0 %v1780
    %2163 = vmatprep.subr.mxu0 0.0
    %2164 = vmatpush1.msra.mxu0 %v1781
    %2165 = vmatprep.subr.mxu0 0.0
    %2166 = vmatpush1.msra.mxu0 %v1782
    %2167 = vmatprep.subr.mxu0 0.0
    %2168 = vmatpush1.msra.mxu0 %v1783
    %2169 = vmatprep.subr.mxu0 0.0
    %2170 = vmatpush1.msra.mxu0 %v1784
    %2171 = vmatprep.subr.mxu0 0.0
    %2172 = vmatpush1.msra.mxu0 %v1785
    %2173 = vmatprep.subr.mxu0 0.0
    %2174 = vmatpush1.msra.mxu0 %v1786
    %2175 = vmatprep.subr.mxu0 0.0
    %2176 = vmatpush1.msra.mxu0 %v1787
    %2177 = vmatprep.subr.mxu0 0.0
    %2178 = vmatpush1.msra.mxu0 %v1788
    %2179 = vmatprep.subr.mxu0 0.0
    %2180 = vmatpush1.msra.mxu0 %v1789
    %2181 = vmatprep.subr.mxu0 0.0
    %2182 = vmatpush1.msra.mxu0 %v1790
    %2183 = vmatprep.subr.mxu0 0.0
    %2184 = vmatpush1.msra.mxu0 %v1791
    %2185 = vmatprep.subr.mxu0 0.0
    %2186 = vmatpush1.msra.mxu0 %v1792
    %2187 = vmatprep.subr.mxu0 0.0
    %2188 = vmatpush1.msra.mxu0 %v1793
    %2189 = vmatprep.subr.mxu0 0.0
    %2190 = vmatpush1.msra.mxu0 %v1794
    %2191 = vmatprep.subr.mxu0 0.0
    %2192 = vmatpush1.msra.mxu0 %v1795
    %2193 = vmatprep.subr.mxu0 0.0
    %2194 = vmatpush1.msra.mxu0 %v1796
    %2195 = vmatprep.subr.mxu0 0.0
    %2196 = vmatpush1.msra.mxu0 %v1797
    %2197 = vmatprep.subr.mxu0 0.0
    %2198 = vmatpush1.msra.mxu0 %v1798
    %2199 = vmatprep.subr.mxu0 0.0
    %2200 = vmatpush1.msra.mxu0 %v1799
    %2201 = vmatprep.subr.mxu0 0.0
    %2202 = vmatpush1.msra.mxu0 %v1800
    %2203 = vmatprep.subr.mxu0 0.0
    %2204 = vmatpush1.msra.mxu0 %v1801
    %2205 = vmatprep.subr.mxu0 0.0
    %2206 = vmatpush1.msra.mxu0 %v1802
    %2207 = vmatprep.subr.mxu0 0.0
    %2208 = vmatpush1.msra.mxu0 %v1803
    %2209 = vmatprep.subr.mxu0 0.0
    %2210 = vmatpush1.msra.mxu0 %v1804
    %2211 = vmatprep.subr.mxu0 0.0
    %2212 = vmatpush1.msra.mxu0 %v1805
    %2213 = vmatprep.subr.mxu0 0.0
    %2214 = vmatpush1.msra.mxu0 %v1806
    %2215 = vmatprep.subr.mxu0 0.0
    %2216 = vmatpush1.msra.mxu0 %v1807
    %2217 = vmatprep.mubr.f32.mxu0 %v1415
    %2218 = vmatmul.mubr.f32.gmra.mrb[0].mxu0 %v1414
    %v2219 = vpop.f32.mrb[0].mxu0
    %v2220 = vadd.f32 %v2150, %v2219
    %v2221 = vpop.f32.mrb[0].mxu0
    %2222 = vdwg.mxu0
    %2223 = vmatprep.subr.mxu0 0.0
    %2224 = vmatpush1.msra.mxu0 %v1808
    %2225 = vmatprep.subr.mxu0 0.0
    %2226 = vmatpush1.msra.mxu0 %v1809
    %2227 = vmatprep.subr.mxu0 0.0
    %2228 = vmatpush1.msra.mxu0 %v1810
    %2229 = vmatprep.subr.mxu0 0.0
    %2230 = vmatpush1.msra.mxu0 %v1811
    %2231 = vmatprep.subr.mxu0 0.0
    %2232 = vmatpush1.msra.mxu0 %v1812
    %2233 = vmatprep.subr.mxu0 0.0
    %2234 = vmatpush1.msra.mxu0 %v1813
    %2235 = vmatprep.subr.mxu0 0.0
    %2236 = vmatpush1.msra.mxu0 %v1814
    %2237 = vmatprep.subr.mxu0 0.0
    %2238 = vmatpush1.msra.mxu0 %v1815
    %2239 = vmatprep.subr.mxu0 0.0
    %2240 = vmatpush1.msra.mxu0 %v1816
    %2241 = vmatprep.subr.mxu0 0.0
    %2242 = vmatpush1.msra.mxu0 %v1817
    %2243 = vmatprep.subr.mxu0 0.0
    %2244 = vmatpush1.msra.mxu0 %v1818
    %2245 = vmatprep.subr.mxu0 0.0
    %2246 = vmatpush1.msra.mxu0 %v1819
    %2247 = vmatprep.subr.mxu0 0.0
    %2248 = vmatpush1.msra.mxu0 %v1820
    %2249 = vmatprep.subr.mxu0 0.0
    %2250 = vmatpush1.msra.mxu0 %v1821
    %2251 = vmatprep.subr.mxu0 0.0
    %2252 = vmatpush1.msra.mxu0 %v1822
    %2253 = vmatprep.subr.mxu0 0.0
    %2254 = vmatpush1.msra.mxu0 %v1823
    %2255 = vmatprep.subr.mxu0 0.0
    %2256 = vmatpush1.msra.mxu0 %v1824
    %2257 = vmatprep.subr.mxu0 0.0
    %2258 = vmatpush1.msra.mxu0 %v1825
    %2259 = vmatprep.subr.mxu0 0.0
    %2260 = vmatpush1.msra.mxu0 %v1826
    %2261 = vmatprep.subr.mxu0 0.0
    %2262 = vmatpush1.msra.mxu0 %v1827
    %2263 = vmatprep.subr.mxu0 0.0
    %2264 = vmatpush1.msra.mxu0 %v1828
    %2265 = vmatprep.subr.mxu0 0.0
    %2266 = vmatpush1.msra.mxu0 %v1829
    %2267 = vmatprep.subr.mxu0 0.0
    %2268 = vmatpush1.msra.mxu0 %v1830
    %2269 = vmatprep.subr.mxu0 0.0
    %2270 = vmatpush1.msra.mxu0 %v1831
    %2271 = vmatprep.subr.mxu0 0.0
    %2272 = vmatpush1.msra.mxu0 %v1832
    %2273 = vmatprep.subr.mxu0 0.0
    %2274 = vmatpush1.msra.mxu0 %v1833
    %2275 = vmatprep.subr.mxu0 0.0
    %2276 = vmatpush1.msra.mxu0 %v1834
    %2277 = vmatprep.subr.mxu0 0.0
    %2278 = vmatpush1.msra.mxu0 %v1835
    %2279 = vmatprep.subr.mxu0 0.0
    %2280 = vmatpush1.msra.mxu0 %v1836
    %2281 = vmatprep.subr.mxu0 0.0
    %2282 = vmatpush1.msra.mxu0 %v1837
    %2283 = vmatprep.subr.mxu0 0.0
    %2284 = vmatpush1.msra.mxu0 %v1838
    %2285 = vmatprep.subr.mxu0 0.0
    %2286 = vmatpush1.msra.mxu0 %v1839
    %2287 = vmatprep.mubr.f32.mxu0 %v1417
    %2288 = vmatmul.mubr.f32.gmra.mrb[0].mxu0 %v1416
    %v2289 = vpop.f32.mrb[0].mxu0
    %v2290 = vadd.f32 %v2220, %v2289
    %v2291 = vpop.f32.mrb[0].mxu0
    %2292 = vdwg.mxu0
    %2293 = vmatprep.subr.mxu0 0.0
    %2294 = vmatpush1.msra.mxu0 %v1840
    %2295 = vmatprep.subr.mxu0 0.0
    %2296 = vmatpush1.msra.mxu0 %v1841
    %2297 = vmatprep.subr.mxu0 0.0
    %2298 = vmatpush1.msra.mxu0 %v1842
    %2299 = vmatprep.subr.mxu0 0.0
    %2300 = vmatpush1.msra.mxu0 %v1843
    %2301 = vmatprep.subr.mxu0 0.0
    %2302 = vmatpush1.msra.mxu0 %v1844
    %2303 = vmatprep.subr.mxu0 0.0
    %2304 = vmatpush1.msra.mxu0 %v1845
    %2305 = vmatprep.subr.mxu0 0.0
    %2306 = vmatpush1.msra.mxu0 %v1846
    %2307 = vmatprep.subr.mxu0 0.0
    %2308 = vmatpush1.msra.mxu0 %v1847
    %2309 = vmatprep.subr.mxu0 0.0
    %2310 = vmatpush1.msra.mxu0 %v1848
    %2311 = vmatprep.subr.mxu0 0.0
    %2312 = vmatpush1.msra.mxu0 %v1849
    %2313 = vmatprep.subr.mxu0 0.0
    %2314 = vmatpush1.msra.mxu0 %v1850
    %2315 = vmatprep.subr.mxu0 0.0
    %2316 = vmatpush1.msra.mxu0 %v1851
    %2317 = vmatprep.subr.mxu0 0.0
    %2318 = vmatpush1.msra.mxu0 %v1852
    %2319 = vmatprep.subr.mxu0 0.0
    %2320 = vmatpush1.msra.mxu0 %v1853
    %2321 = vmatprep.subr.mxu0 0.0
    %2322 = vmatpush1.msra.mxu0 %v1854
    %2323 = vmatprep.subr.mxu0 0.0
    %2324 = vmatpush1.msra.mxu0 %v1855
    %2325 = vmatprep.subr.mxu0 0.0
    %2326 = vmatpush1.msra.mxu0 %v1856
    %2327 = vmatprep.subr.mxu0 0.0
    %2328 = vmatpush1.msra.mxu0 %v1857
    %2329 = vmatprep.subr.mxu0 0.0
    %2330 = vmatpush1.msra.mxu0 %v1858
    %2331 = vmatprep.subr.mxu0 0.0
    %2332 = vmatpush1.msra.mxu0 %v1859
    %2333 = vmatprep.subr.mxu0 0.0
    %2334 = vmatpush1.msra.mxu0 %v1860
    %2335 = vmatprep.subr.mxu0 0.0
    %2336 = vmatpush1.msra.mxu0 %v1861
    %2337 = vmatprep.subr.mxu0 0.0
    %2338 = vmatpush1.msra.mxu0 %v1862
    %2339 = vmatprep.subr.mxu0 0.0
    %2340 = vmatpush1.msra.mxu0 %v1863
    %2341 = vmatprep.subr.mxu0 0.0
    %2342 = vmatpush1.msra.mxu0 %v1864
    %2343 = vmatprep.subr.mxu0 0.0
    %2344 = vmatpush1.msra.mxu0 %v1865
    %2345 = vmatprep.subr.mxu0 0.0
    %2346 = vmatpush1.msra.mxu0 %v1866
    %2347 = vmatprep.subr.mxu0 0.0
    %2348 = vmatpush1.msra.mxu0 %v1867
    %2349 = vmatprep.subr.mxu0 0.0
    %2350 = vmatpush1.msra.mxu0 %v1868
    %2351 = vmatprep.subr.mxu0 0.0
    %2352 = vmatpush1.msra.mxu0 %v1869
    %2353 = vmatprep.subr.mxu0 0.0
    %2354 = vmatpush1.msra.mxu0 %v1870
    %2355 = vmatprep.subr.mxu0 0.0
    %2356 = vmatpush1.msra.mxu0 %v1871
    %2357 = vmatprep.mubr.f32.mxu0 %v1419
    %2358 = vmatmul.mubr.f32.gmra.mrb[0].mxu0 %v1418
    %v2359 = vpop.f32.mrb[0].mxu0
    %v2360 = vadd.f32 %v2290, %v2359
    %v2361 = vpop.f32.mrb[0].mxu0
    %2362 = vdwg.mxu0
    %2363 = vmatprep.subr.mxu0 0.0
    %2364 = vmatpush1.msra.mxu0 %v1872
    %2365 = vmatprep.subr.mxu0 0.0
    %2366 = vmatpush1.msra.mxu0 %v1873
    %2367 = vmatprep.subr.mxu0 0.0
    %2368 = vmatpush1.msra.mxu0 %v1874
    %2369 = vmatprep.subr.mxu0 0.0
    %2370 = vmatpush1.msra.mxu0 %v1875
    %2371 = vmatprep.subr.mxu0 0.0
    %2372 = vmatpush1.msra.mxu0 %v1876
    %2373 = vmatprep.subr.mxu0 0.0
    %2374 = vmatpush1.msra.mxu0 %v1877
    %2375 = vmatprep.subr.mxu0 0.0
    %2376 = vmatpush1.msra.mxu0 %v1878
    %2377 = vmatprep.subr.mxu0 0.0
    %2378 = vmatpush1.msra.mxu0 %v1879
    %2379 = vmatprep.subr.mxu0 0.0
    %2380 = vmatpush1.msra.mxu0 %v1880
    %2381 = vmatprep.subr.mxu0 0.0
    %2382 = vmatpush1.msra.mxu0 %v1881
    %2383 = vmatprep.subr.mxu0 0.0
    %2384 = vmatpush1.msra.mxu0 %v1882
    %2385 = vmatprep.subr.mxu0 0.0
    %2386 = vmatpush1.msra.mxu0 %v1883
    %2387 = vmatprep.subr.mxu0 0.0
    %2388 = vmatpush1.msra.mxu0 %v1884
    %2389 = vmatprep.subr.mxu0 0.0
    %2390 = vmatpush1.msra.mxu0 %v1885
    %2391 = vmatprep.subr.mxu0 0.0
    %2392 = vmatpush1.msra.mxu0 %v1886
    %2393 = vmatprep.subr.mxu0 0.0
    %2394 = vmatpush1.msra.mxu0 %v1887
    %2395 = vmatprep.subr.mxu0 0.0
    %2396 = vmatpush1.msra.mxu0 %v1888
    %2397 = vmatprep.subr.mxu0 0.0
    %2398 = vmatpush1.msra.mxu0 %v1889
    %2399 = vmatprep.subr.mxu0 0.0
    %2400 = vmatpush1.msra.mxu0 %v1890
    %2401 = vmatprep.subr.mxu0 0.0
    %2402 = vmatpush1.msra.mxu0 %v1891
    %2403 = vmatprep.subr.mxu0 0.0
    %2404 = vmatpush1.msra.mxu0 %v1892
    %2405 = vmatprep.subr.mxu0 0.0
    %2406 = vmatpush1.msra.mxu0 %v1893
    %2407 = vmatprep.subr.mxu0 0.0
    %2408 = vmatpush1.msra.mxu0 %v1894
    %2409 = vmatprep.subr.mxu0 0.0
    %2410 = vmatpush1.msra.mxu0 %v1895
    %2411 = vmatprep.subr.mxu0 0.0
    %2412 = vmatpush1.msra.mxu0 %v1896
    %2413 = vmatprep.subr.mxu0 0.0
    %2414 = vmatpush1.msra.mxu0 %v1897
    %2415 = vmatprep.subr.mxu0 0.0
    %2416 = vmatpush1.msra.mxu0 %v1898
    %2417 = vmatprep.subr.mxu0 0.0
    %2418 = vmatpush1.msra.mxu0 %v1899
    %2419 = vmatprep.subr.mxu0 0.0
    %2420 = vmatpush1.msra.mxu0 %v1900
    %2421 = vmatprep.subr.mxu0 0.0
    %2422 = vmatpush1.msra.mxu0 %v1901
    %2423 = vmatprep.subr.mxu0 0.0
    %2424 = vmatpush1.msra.mxu0 %v1902
    %2425 = vmatprep.subr.mxu0 0.0
    %2426 = vmatpush1.msra.mxu0 %v1903
    %2427 = vmatprep.mubr.f32.mxu0 %v1421
    %2428 = vmatmul.mubr.f32.gmra.mrb[0].mxu0 %v1420
    %v2429 = vpop.f32.mrb[0].mxu0
    %v2430 = vadd.f32 %v2360, %v2429
    %v2431 = vpop.f32.mrb[0].mxu0
    %2432 = vdwg.mxu0
    %2433 = vmatprep.subr.mxu0 0.0
    %2434 = vmatpush1.msra.mxu0 %v1904
    %2435 = vmatprep.subr.mxu0 0.0
    %2436 = vmatpush1.msra.mxu0 %v1905
    %2437 = vmatprep.subr.mxu0 0.0
    %2438 = vmatpush1.msra.mxu0 %v1906
    %2439 = vmatprep.subr.mxu0 0.0
    %2440 = vmatpush1.msra.mxu0 %v1907
    %2441 = vmatprep.subr.mxu0 0.0
    %2442 = vmatpush1.msra.mxu0 %v1908
    %2443 = vmatprep.subr.mxu0 0.0
    %2444 = vmatpush1.msra.mxu0 %v1909
    %2445 = vmatprep.subr.mxu0 0.0
    %2446 = vmatpush1.msra.mxu0 %v1910
    %2447 = vmatprep.subr.mxu0 0.0
    %2448 = vmatpush1.msra.mxu0 %v1911
    %2449 = vmatprep.subr.mxu0 0.0
    %2450 = vmatpush1.msra.mxu0 %v1912
    %2451 = vmatprep.subr.mxu0 0.0
    %2452 = vmatpush1.msra.mxu0 %v1913
    %2453 = vmatprep.subr.mxu0 0.0
    %2454 = vmatpush1.msra.mxu0 %v1914
    %2455 = vmatprep.subr.mxu0 0.0
    %2456 = vmatpush1.msra.mxu0 %v1915
    %2457 = vmatprep.subr.mxu0 0.0
    %2458 = vmatpush1.msra.mxu0 %v1916
    %2459 = vmatprep.subr.mxu0 0.0
    %2460 = vmatpush1.msra.mxu0 %v1917
    %2461 = vmatprep.subr.mxu0 0.0
    %2462 = vmatpush1.msra.mxu0 %v1918
    %2463 = vmatprep.subr.mxu0 0.0
    %2464 = vmatpush1.msra.mxu0 %v1919
    %2465 = vmatprep.subr.mxu0 0.0
    %2466 = vmatpush1.msra.mxu0 %v1920
    %2467 = vmatprep.subr.mxu0 0.0
    %2468 = vmatpush1.msra.mxu0 %v1921
    %2469 = vmatprep.subr.mxu0 0.0
    %2470 = vmatpush1.msra.mxu0 %v1922
    %2471 = vmatprep.subr.mxu0 0.0
    %2472 = vmatpush1.msra.mxu0 %v1923
    %2473 = vmatprep.subr.mxu0 0.0
    %2474 = vmatpush1.msra.mxu0 %v1924
    %2475 = vmatprep.subr.mxu0 0.0
    %2476 = vmatpush1.msra.mxu0 %v1925
    %2477 = vmatprep.subr.mxu0 0.0
    %2478 = vmatpush1.msra.mxu0 %v1926
    %2479 = vmatprep.subr.mxu0 0.0
    %2480 = vmatpush1.msra.mxu0 %v1927
    %2481 = vmatprep.subr.mxu0 0.0
    %2482 = vmatpush1.msra.mxu0 %v1928
    %2483 = vmatprep.subr.mxu0 0.0
    %2484 = vmatpush1.msra.mxu0 %v1929
    %2485 = vmatprep.subr.mxu0 0.0
    %2486 = vmatpush1.msra.mxu0 %v1930
    %2487 = vmatprep.subr.mxu0 0.0
    %2488 = vmatpush1.msra.mxu0 %v1931
    %2489 = vmatprep.subr.mxu0 0.0
    %2490 = vmatpush1.msra.mxu0 %v1932
    %2491 = vmatprep.subr.mxu0 0.0
    %2492 = vmatpush1.msra.mxu0 %v1933
    %2493 = vmatprep.subr.mxu0 0.0
    %2494 = vmatpush1.msra.mxu0 %v1934
    %2495 = vmatprep.subr.mxu0 0.0
    %2496 = vmatpush1.msra.mxu0 %v1935
    %2497 = vmatprep.mubr.f32.mxu0 %v1423
    %2498 = vmatmul.mubr.f32.gmra.mrb[0].mxu0 %v1422
    %v2499 = vpop.f32.mrb[0].mxu0
    %v2500 = vadd.f32 %v2430, %v2499
    %v2501 = vpop.f32.mrb[0].mxu0
    %2502 = vdwg.mxu0
    %v2503 = vadd.f32 %v371, %v2500
    %2504 = vadd.xlane.f32.xlu0 %v2503
    %v2505 = vpop.xlane.xlu0 %2504
    %v2506 = vmul.f32 %v2505, %v348
    %v2507 = vsub.f32 %v2503, %v2506
    %v2508 = vmul.f32 %v2507, %v2507
    %2509 = vadd.xlane.f32.xlu0 %v2508
    %v2510 = vpop.xlane.xlu0 %2509
    %v2511 = vmul.f32 %v2510, %v348
    %v2512 = vadd.f32 %v2511, 1e-05
    %v2513 = vrsqrt.pop %v2512
    %v2514 = vmul.f32 %v2507, %v2513
    %v2515 = vld [vmem:[%s13] sm:$0xff]
    %v2516 = vld [vmem:[%s13 + $0x8] sm:$0xff]
    %v2517 = vld [vmem:[%s13 + $0x10] sm:$0xff]
    %v2518 = vld [vmem:[%s13 + $0x18] sm:$0xff]
    %v2519 = vld [vmem:[%s13 + $0x20] sm:$0xff]
    %v2520 = vld [vmem:[%s13 + $0x28] sm:$0xff]
    %v2521 = vld [vmem:[%s13 + $0x30] sm:$0xff]
    %v2522 = vld [vmem:[%s13 + $0x38] sm:$0xff]
    %v2523 = vld [vmem:[%s13 + $0x40] sm:$0xff]
    %v2524 = vld [vmem:[%s13 + $0x48] sm:$0xff]
    %v2525 = vld [vmem:[%s13 + $0x50] sm:$0xff]
    %v2526 = vld [vmem:[%s13 + $0x58] sm:$0xff]
    %v2527 = vld [vmem:[%s13 + $0x60] sm:$0xff]
    %v2528 = vld [vmem:[%s13 + $0x68] sm:$0xff]
    %v2529 = vld [vmem:[%s13 + $0x70] sm:$0xff]
    %v2530 = vld [vmem:[%s13 + $0x78] sm:$0xff]
    %v2531 = vld [vmem:[%s14] sm:$0x1]
    %v2533 = vlaneseq
    %v2534 = vshrl.u32 %v2533, 7
    %v2535 = vsub.s32 0, %v2534
    %v2536 = vrot.slane %v2531, %v2535
    %2538 = vmatprep.subr.mxu0 0.0
    %2539 = vmatpush1.msra.mxu0 %v2515
    %2540 = vmatprep.subr.mxu0 0.0
    %2541 = vmatpush1.msra.mxu0 %v2516
    %2542 = vmatprep.subr.mxu0 0.0
    %2543 = vmatpush1.msra.mxu0 %v2517
    %2544 = vmatprep.subr.mxu0 0.0
    %2545 = vmatpush1.msra.mxu0 %v2518
    %2546 = vmatprep.subr.mxu0 0.0
    %2547 = vmatpush1.msra.mxu0 %v2519
    %2548 = vmatprep.subr.mxu0 0.0
    %2549 = vmatpush1.msra.mxu0 %v2520
    %2550 = vmatprep.subr.mxu0 0.0
    %2551 = vmatpush1.msra.mxu0 %v2521
    %2552 = vmatprep.subr.mxu0 0.0
    %2553 = vmatpush1.msra.mxu0 %v2522
    %2554 = vmatprep.subr.mxu0 0.0
    %2555 = vmatpush1.msra.mxu0 %v2523
    %2556 = vmatprep.subr.mxu0 0.0
    %2557 = vmatpush1.msra.mxu0 %v2524
    %2558 = vmatprep.subr.mxu0 0.0
    %2559 = vmatpush1.msra.mxu0 %v2525
    %2560 = vmatprep.subr.mxu0 0.0
    %2561 = vmatpush1.msra.mxu0 %v2526
    %2562 = vmatprep.subr.mxu0 0.0
    %2563 = vmatpush1.msra.mxu0 %v2527
    %2564 = vmatprep.subr.mxu0 0.0
    %2565 = vmatpush1.msra.mxu0 %v2528
    %2566 = vmatprep.subr.mxu0 0.0
    %2567 = vmatpush1.msra.mxu0 %v2529
    %2568 = vmatprep.subr.mxu0 0.0
    %2569 = vmatpush1.msra.mxu0 %v2530
    %2570 = vmatprep.subr.mxu0 0.0
    %2571 = vmatpush1.msra.mxu0 0.0
    %2572 = vmatprep.subr.mxu0 0.0
    %2573 = vmatpush1.msra.mxu0 0.0
    %2574 = vmatprep.subr.mxu0 0.0
    %2575 = vmatpush1.msra.mxu0 0.0
    %2576 = vmatprep.subr.mxu0 0.0
    %2577 = vmatpush1.msra.mxu0 0.0
    %2578 = vmatprep.subr.mxu0 0.0
    %2579 = vmatpush1.msra.mxu0 0.0
    %2580 = vmatprep.subr.mxu0 0.0
    %2581 = vmatpush1.msra.mxu0 0.0
    %2582 = vmatprep.subr.mxu0 0.0
    %2583 = vmatpush1.msra.mxu0 0.0
    %2584 = vmatprep.subr.mxu0 0.0
    %2585 = vmatpush1.msra.mxu0 0.0
    %2586 = vmatprep.subr.mxu0 0.0
    %2587 = vmatpush1.msra.mxu0 0.0
    %2588 = vmatprep.subr.mxu0 0.0
    %2589 = vmatpush1.msra.mxu0 0.0
    %2590 = vmatprep.subr.mxu0 0.0
    %2591 = vmatpush1.msra.mxu0 0.0
    %2592 = vmatprep.subr.mxu0 0.0
    %2593 = vmatpush1.msra.mxu0 0.0
    %2594 = vmatprep.subr.mxu0 0.0
    %2595 = vmatpush1.msra.mxu0 0.0
    %2596 = vmatprep.subr.mxu0 0.0
    %2597 = vmatpush1.msra.mxu0 0.0
    %2598 = vmatprep.subr.mxu0 0.0
    %2599 = vmatpush1.msra.mxu0 0.0
    %2600 = vmatprep.subr.mxu0 0.0
    %2601 = vmatpush1.msra.mxu0 0.0
    %2602 = vmatprep.mubr.f32.mxu0 0.0
    %2603 = vmatmul.mubr.f32.gmra.mrb[0].mxu0 %v2514
    %v2604 = vpop.f32.mrb[0].mxu0
    %v2605 = vadd.f32 %v2536, %v2604
    %v2606 = vpop.f32.mrb[0].mxu0
    %2607 = vdwg.mxu0
    %2608 = vst [vmem:[#allocation5] sm:$0xff] %v2605
    // Predicated region
    $region66: #{net_forward.1} parent=1 // pred_check
      _
    $region67: #{net_forward.1} parent=1 // pred_check_branch
      %2610 = sbr.rel (0) target = $region69
    $region68: #{net_forward.1} parent=1 // pred_region
      %s2612 = ssub.s32 128, 128
      %2613 = vsyncadd [#allocation4], %s2612
      %s2615 = sshll.u32 [#allocation5], 4
      %s2616 = int_to_ptr.vmem [resolvable:$true] %s2615
      %2618 = dma.vmem_to_hbm [thread:$0]  %s2616, 128, %s15, [#allocation4]
    $region69: #{net_forward.1} parent=1 // pred_fallthru
      _
    // Predicated region
    $region70: #{net_forward.1} parent=1 // pred_check
      _
    $region71: #{net_forward.1} parent=1 // pred_check_branch
      %2620 = sbr.rel (0) target = $region73
    $region72: #{net_forward.1} parent=1 // pred_region
      %2621 = dma.done [#allocation4], 128
    $region73: #{net_forward.1} parent=1 // pred_fallthru
      _
    %2622 = vsyncpa [#allocation3], 1
    %2623 = vsyncpa [#allocation4], 1

</llo_original>
